<compile_context>
chip_gen: v6e
topology: v6e:2x2x1
jax: 0.10.0
libtpu: 0.0.40
codegen_flags: <defaults>
</compile_context>

<pallas_src>
import functools

import jax
import jax.numpy as jnp
import numpy as np
from jax.experimental import pallas as pl
from jax.experimental.pallas import tpu as pltpu


def _round_up(x, m):
    return ((x + m - 1) // m) * m


def _device_kind():
    try:
        return jax.devices()[0].device_kind.lower()
    except Exception:
        return ""


def _is_v7(kind):
    return ("v7" in kind) or ("tpu7" in kind)


def _physical_vmem_bytes(kind):
    # Cap by known per-TC physical VMEM for the generation; query the runtime
    # when available so the limit never exceeds what the chip actually has.
    cap = (64 << 20) if _is_v7(kind) else (128 << 20)
    try:
        return min(int(pltpu.get_tpu_info().vmem_capacity_bytes), cap)
    except Exception:
        return cap


# ----------------------------------------------------------------------------- kernels
def _dense(a, w, b):
    # Cast activations only when a low-precision weight path is active
    # (a.dtype != w.dtype); f32 weights emit no cast at all.
    if a.dtype != w.dtype:
        a = a.astype(w.dtype)
    acc = jnp.dot(a, w, preferred_element_type=jnp.float32)
    return acc + b.astype(jnp.float32)


def mlp_kernel(x_ref, w1_ref, b1_ref, wm_ref, bm_ref, w3_ref, b3_ref, o_ref,
               *, layer_num, use_relu):
    """One batch tile, entirely in VMEM.  layer_num >= 1.

    x_ref : [TB, D]   input tile (f32)
    w1_ref: [D, H]    fc1 weight (transposed),  b1_ref: [1, H]
    wm_ref: [L, H, H] stacked middle weights (transposed), bm_ref: [L, 1, H]
    w3_ref: [H, O]    fc3 weight (transposed),  b3_ref: [1, O]
    o_ref : [TB, O]   output tile (exact width; lane-masked store)
    """
    h = _dense(x_ref[...], w1_ref[...], b1_ref[...])
    if use_relu:
        h = jnp.maximum(h, 0.0)

    if layer_num <= 8:
        # Straight-line code: lets the scheduler overlap next-layer weight
        # loads with the current layer's MXU pops.
        for l in range(layer_num):
            h = _dense(h, wm_ref[l], bm_ref[l])
            if use_relu:
                h = jnp.maximum(h, 0.0)
    else:
        def body(l, h):
            h = _dense(h, wm_ref[l], bm_ref[l])
            return jnp.maximum(h, 0.0) if use_relu else h
        h = jax.lax.fori_loop(0, layer_num, body, h, unroll=8)

    o_ref[...] = _dense(h, w3_ref[...], b3_ref[...]).astype(o_ref.dtype)
    # TODO(synk): Dropout (drop_out != 0) is not implemented; the reference
    # script uses drop_out=0 so forward semantics are unaffected.


def mlp_kernel_shallow(x_ref, w1_ref, b1_ref, w3_ref, b3_ref, o_ref, *, use_relu):
    """layer_num == 0 path (empty nn.Sequential): no middle stack is DMA'd."""
    h = _dense(x_ref[...], w1_ref[...], b1_ref[...])
    if use_relu:
        h = jnp.maximum(h, 0.0)
    o_ref[...] = _dense(h, w3_ref[...], b3_ref[...]).astype(o_ref.dtype)


# ----------------------------------------------------------------------------- wrapper
def net_forward(x, params, *, layer_num, use_relu=True, weight_dtype=jnp.float32):
    """Pallas wrapper: grid over batch tiles, weights resident across the grid."""
    w1, b1, wm, bm, w3, b3 = params
    B, D = x.shape
    H = w1.shape[1]
    O = w3.shape[1]

    kind = _device_kind()
    num_tc = 2 if _is_v7(kind) else 1           # grid steps target: one tile per TC
    phys_vmem = _physical_vmem_bytes(kind)
    budget = int(0.85 * phys_vmem)

    # bf16 weights only pay off once the contraction dim approaches the MXU
    # tile; below that the per-layer f32->bf16 pack is pure VPU overhead.
    if weight_dtype != jnp.float32 and min(D, H) < 128:
        weight_dtype = jnp.float32
    w1 = w1.astype(weight_dtype)
    wm = wm.astype(weight_dtype)
    w3 = w3.astype(weight_dtype)

    w_itemsize = jnp.dtype(weight_dtype).itemsize
    weight_bytes = int((w1.size + wm.size + w3.size) * w_itemsize
                       + (b1.size + bm.size + b3.size) * 4)

    # VMEM accounting: 2x for (potentially) double-buffered weight blocks,
    # double-buffered x/out tiles, plus live-activation headroom per row.
    per_row_bytes = 2 * (D + O) * 4 + 4 * H * 4
    avail = budget - 2 * weight_bytes - (2 << 20)
    if avail < 8 * per_row_bytes:
        # TODO(synk): stream middle layers as [1,H,H] blocks (second grid axis
        # or pltpu.emit_pipeline) for weight stacks that overflow v7x's 64 MiB
        # VMEM; not needed at these model sizes.
        raise ValueError(
            f"MLP weights ({weight_bytes} B) do not fit the VMEM budget "
            f"({budget} B) with resident weights; stream the middle layers.")
    max_tb = max(8, (avail // per_row_bytes) // 8 * 8)

    # Batch tiling: split B across the TensorCores, sublane-aligned, capped by
    # the VMEM budget.  No padding unless tb does not divide B (ragged B).
    tb = _round_up(pl.cdiv(B, num_tc), 8)
    tb = max(8, min(tb, max_tb))
    B_pad = _round_up(B, tb)
    x_in = x if B_pad == B else jnp.pad(x, ((0, B_pad - B), (0, 0)))
    grid = (B_pad // tb,)

    vmem_need = 2 * weight_bytes + tb * per_row_bytes + (2 << 20)
    vmem_limit = int(min(budget, max(vmem_need, min(32 << 20, budget))))

    flops = 2 * B_pad * (D * H + layer_num * H * H + H * O)
    bytes_accessed = int(B_pad * (D + O) * x.dtype.itemsize + weight_bytes)

    in_specs = [
        pl.BlockSpec((tb, D), lambda i: (i, 0)),       # x tile (pipelined)
        pl.BlockSpec((D, H), lambda i: (0, 0)),        # fc1 W^T (resident)
        pl.BlockSpec((1, H), lambda i: (0, 0)),        # fc1 b
    ]
    args = [x_in, w1, b1]
    if layer_num > 0:
        in_specs += [
            pl.BlockSpec((layer_num, H, H), lambda i: (0, 0, 0)),  # middle W^T stack
            pl.BlockSpec((layer_num, 1, H), lambda i: (0, 0, 0)),  # middle b stack
        ]
        args += [wm, bm]
        kernel = functools.partial(mlp_kernel, layer_num=layer_num, use_relu=use_relu)
    else:
        kernel = functools.partial(mlp_kernel_shallow, use_relu=use_relu)
    in_specs += [
        pl.BlockSpec((H, O), lambda i: (0, 0)),        # fc3 W^T
        pl.BlockSpec((1, O), lambda i: (0, 0)),        # fc3 b
    ]
    args += [w3, b3]

    out = pl.pallas_call(
        kernel,
        out_shape=jax.ShapeDtypeStruct((B_pad, O), x.dtype),
        grid=grid,
        in_specs=in_specs,
        out_specs=pl.BlockSpec((tb, O), lambda i: (i, 0)),
        compiler_params=pltpu.CompilerParams(
            dimension_semantics=("parallel",),
            vmem_limit_bytes=vmem_limit,
        ),
        cost_estimate=pl.CostEstimate(flops=int(flops), transcendentals=0,
                                      bytes_accessed=bytes_accessed),
    )(*args)

    return out if B_pad == B else out[:B]


# ----------------------------------------------------------------------------- params & reference
def init_params(key, input_dim, output_dim, hidden_dim, layer_num):
    """Deterministic init mimicking nn.Linear default: U(-1/sqrt(fan_in), ...)."""
    def linear(k, fan_in, fan_out):
        kw, kb = jax.random.split(k)
        bound = 1.0 / np.sqrt(fan_in)
        w = jax.random.uniform(kw, (fan_in, fan_out), jnp.float32, -bound, bound)
        b = jax.random.uniform(kb, (1, fan_out), jnp.float32, -bound, bound)
        return w, b  # stored already transposed to [in, out]

    keys = jax.random.split(key, 2 + max(layer_num, 1))
    w1, b1 = linear(keys[0], input_dim, hidden_dim)
    wm_list, bm_list = [], []
    for l in range(layer_num):
        w, b = linear(keys[1 + l], hidden_dim, hidden_dim)
        wm_list.append(w)
        bm_list.append(b)
    if layer_num > 0:
        wm = jnp.stack(wm_list, axis=0)                # [L, H, H]
        bm = jnp.stack(bm_list, axis=0)                # [L, 1, H]
    else:
        wm = jnp.zeros((0, hidden_dim, hidden_dim), jnp.float32)
        bm = jnp.zeros((0, 1, hidden_dim), jnp.float32)
    w3, b3 = linear(keys[-1], hidden_dim, output_dim)
    return w1, b1, wm, bm, w3, b3


def reference_forward(x, params, *, layer_num, use_relu=True):
    """Pure-JAX reference matching the PyTorch forward."""
    w1, b1, wm, bm, w3, b3 = params

    def dense(a, w, b):
        return jnp.dot(a, w, preferred_element_type=jnp.float32) + b

    h = dense(x, w1, b1)
    if use_relu:
        h = jnp.maximum(h, 0.0)
    for l in range(layer_num):
        h = dense(h, wm[l], bm[l])
        if use_relu:
            h = jnp.maximum(h, 0.0)
    return dense(h, w3, b3)


if __name__ == "__main__":
    # Shapes consistent with the module's forward: x is [batch, input_dim].
    B, INPUT_DIM, HIDDEN_DIM, OUTPUT_DIM, LAYER_NUM = 512, 16, 32, 8, 2

    key = jax.random.PRNGKey(0)
    kx, kp = jax.random.split(key)
    x = jax.random.normal(kx, (B, INPUT_DIM), dtype=jnp.float32)
    params = init_params(kp, INPUT_DIM, OUTPUT_DIM, HIDDEN_DIM, LAYER_NUM)

    out = jax.block_until_ready(
        net_forward(x, params, layer_num=LAYER_NUM, use_relu=True))
    ref = reference_forward(x, params, layer_num=LAYER_NUM, use_relu=True)
    np.testing.assert_allclose(np.asarray(out), np.asarray(ref),
                               rtol=1e-5, atol=1e-5)

    # layer_num == 0 path (empty fc2 Sequential): exercises the shallow kernel.
    params0 = init_params(jax.random.PRNGKey(1), INPUT_DIM, OUTPUT_DIM,
                          HIDDEN_DIM, 0)
    out0 = jax.block_until_ready(
        net_forward(x, params0, layer_num=0, use_relu=True))
    ref0 = reference_forward(x, params0, layer_num=0, use_relu=True)
    np.testing.assert_allclose(np.asarray(out0), np.asarray(ref0),
                               rtol=1e-5, atol=1e-5)

    print("KERNEL_OK")
</pallas_src>

<mosaic_0001>
module attributes {stable_mosaic.version = 11 : i64} {
  func.func @mlp_kernel(%arg0: i32, %arg1: memref<512x16xf32, #tpu.memory_space<vmem>>, %arg2: memref<16x32xf32, #tpu.memory_space<vmem>>, %arg3: memref<1x32xf32, #tpu.memory_space<vmem>>, %arg4: memref<2x32x32xf32, #tpu.memory_space<vmem>>, %arg5: memref<2x1x32xf32, #tpu.memory_space<vmem>>, %arg6: memref<32x8xf32, #tpu.memory_space<vmem>>, %arg7: memref<1x8xf32, #tpu.memory_space<vmem>>, %arg8: memref<512x8xf32, #tpu.memory_space<vmem>>) attributes {dimension_semantics = [#tpu.dimension_semantics<parallel>], iteration_bounds = array<i64: 1>, scalar_prefetch = 0 : i64, scratch_operands = 0 : i64, tpu.core_type = #tpu.core_type<tc>, window_params = [{transform_indices = @transform_0, window_bounds = array<i64: 512, 16>}, {pipeline_mode = #tpu.pipeline_mode<synchronous>, transform_indices = @transform_1, window_bounds = array<i64: 16, 32>}, {pipeline_mode = #tpu.pipeline_mode<synchronous>, transform_indices = @transform_2, window_bounds = array<i64: 1, 32>}, {pipeline_mode = #tpu.pipeline_mode<synchronous>, transform_indices = @transform_3, window_bounds = array<i64: 2, 32, 32>}, {pipeline_mode = #tpu.pipeline_mode<synchronous>, transform_indices = @transform_4, window_bounds = array<i64: 2, 1, 32>}, {pipeline_mode = #tpu.pipeline_mode<synchronous>, transform_indices = @transform_5, window_bounds = array<i64: 32, 8>}, {pipeline_mode = #tpu.pipeline_mode<synchronous>, transform_indices = @transform_6, window_bounds = array<i64: 1, 8>}, {transform_indices = @transform_7, window_bounds = array<i64: 512, 8>}]} {
    %c0 = arith.constant 0 : index
    %c0_0 = arith.constant 0 : index
    %0 = vector.load %arg1[%c0, %c0_0] : memref<512x16xf32, #tpu.memory_space<vmem>>, vector<512x16xf32>
    %c0_1 = arith.constant 0 : index
    %c0_2 = arith.constant 0 : index
    %1 = vector.load %arg2[%c0_1, %c0_2] : memref<16x32xf32, #tpu.memory_space<vmem>>, vector<16x32xf32>
    %c0_3 = arith.constant 0 : index
    %c0_4 = arith.constant 0 : index
    %2 = vector.load %arg3[%c0_3, %c0_4] : memref<1x32xf32, #tpu.memory_space<vmem>>, vector<1x32xf32>
    %cst = arith.constant dense<0.000000e+00> : vector<512x32xf32>
    %3 = tpu.matmul %0, %1, %cst {dimension_numbers = #tpu.dot_dimension_numbers<[1], [0], [0], [1], [0, 0, 1, 1], [], []>} : vector<512x16xf32>, vector<16x32xf32>, vector<512x32xf32> -> vector<512x32xf32>
    %4 = vector.broadcast %2 : vector<1x32xf32> to vector<512x32xf32>
    %5 = arith.addf %3, %4 : vector<512x32xf32>
    %cst_5 = arith.constant 0.000000e+00 : f32
    %6 = vector.broadcast %cst_5 : f32 to vector<512x32xf32>
    %7 = arith.maximumf %5, %6 : vector<512x32xf32>
    %c0_6 = arith.constant 0 : index
    %c0_7 = arith.constant 0 : index
    %c0_8 = arith.constant 0 : index
    %8 = vector.load %arg4[%c0_6, %c0_7, %c0_8] : memref<2x32x32xf32, #tpu.memory_space<vmem>>, vector<1x32x32xf32>
    %9 = vector.shape_cast %8 : vector<1x32x32xf32> to vector<32x32xf32>
    %c0_9 = arith.constant 0 : index
    %c0_10 = arith.constant 0 : index
    %c0_11 = arith.constant 0 : index
    %10 = vector.load %arg5[%c0_9, %c0_10, %c0_11] : memref<2x1x32xf32, #tpu.memory_space<vmem>>, vector<1x1x32xf32>
    %11 = vector.shape_cast %10 : vector<1x1x32xf32> to vector<1x32xf32>
    %cst_12 = arith.constant dense<0.000000e+00> : vector<512x32xf32>
    %12 = tpu.matmul %7, %9, %cst_12 {dimension_numbers = #tpu.dot_dimension_numbers<[1], [0], [0], [1], [0, 0, 1, 1], [], []>} : vector<512x32xf32>, vector<32x32xf32>, vector<512x32xf32> -> vector<512x32xf32>
    %13 = vector.broadcast %11 : vector<1x32xf32> to vector<512x32xf32>
    %14 = arith.addf %12, %13 : vector<512x32xf32>
    %cst_13 = arith.constant 0.000000e+00 : f32
    %15 = vector.broadcast %cst_13 : f32 to vector<512x32xf32>
    %16 = arith.maximumf %14, %15 : vector<512x32xf32>
    %c1 = arith.constant 1 : index
    %c0_14 = arith.constant 0 : index
    %c0_15 = arith.constant 0 : index
    %17 = vector.load %arg4[%c1, %c0_14, %c0_15] : memref<2x32x32xf32, #tpu.memory_space<vmem>>, vector<1x32x32xf32>
    %18 = vector.shape_cast %17 : vector<1x32x32xf32> to vector<32x32xf32>
    %c1_16 = arith.constant 1 : index
    %c0_17 = arith.constant 0 : index
    %c0_18 = arith.constant 0 : index
    %19 = vector.load %arg5[%c1_16, %c0_17, %c0_18] : memref<2x1x32xf32, #tpu.memory_space<vmem>>, vector<1x1x32xf32>
    %20 = vector.shape_cast %19 : vector<1x1x32xf32> to vector<1x32xf32>
    %cst_19 = arith.constant dense<0.000000e+00> : vector<512x32xf32>
    %21 = tpu.matmul %16, %18, %cst_19 {dimension_numbers = #tpu.dot_dimension_numbers<[1], [0], [0], [1], [0, 0, 1, 1], [], []>} : vector<512x32xf32>, vector<32x32xf32>, vector<512x32xf32> -> vector<512x32xf32>
    %22 = vector.broadcast %20 : vector<1x32xf32> to vector<512x32xf32>
    %23 = arith.addf %21, %22 : vector<512x32xf32>
    %cst_20 = arith.constant 0.000000e+00 : f32
    %24 = vector.broadcast %cst_20 : f32 to vector<512x32xf32>
    %25 = arith.maximumf %23, %24 : vector<512x32xf32>
    %c0_21 = arith.constant 0 : index
    %c0_22 = arith.constant 0 : index
    %26 = vector.load %arg6[%c0_21, %c0_22] : memref<32x8xf32, #tpu.memory_space<vmem>>, vector<32x8xf32>
    %c0_23 = arith.constant 0 : index
    %c0_24 = arith.constant 0 : index
    %27 = vector.load %arg7[%c0_23, %c0_24] : memref<1x8xf32, #tpu.memory_space<vmem>>, vector<1x8xf32>
    %cst_25 = arith.constant dense<0.000000e+00> : vector<512x8xf32>
    %28 = tpu.matmul %25, %26, %cst_25 {dimension_numbers = #tpu.dot_dimension_numbers<[1], [0], [0], [1], [0, 0, 1, 1], [], []>} : vector<512x32xf32>, vector<32x8xf32>, vector<512x8xf32> -> vector<512x8xf32>
    %29 = vector.broadcast %27 : vector<1x8xf32> to vector<512x8xf32>
    %30 = arith.addf %28, %29 : vector<512x8xf32>
    %c0_26 = arith.constant 0 : index
    %c0_27 = arith.constant 0 : index
    %31 = vector.load %arg8[%c0_26, %c0_27] : memref<512x8xf32, #tpu.memory_space<vmem>>, vector<512x8xf32>
    tpu.vector_store %arg8[%c0_26, %c0_27], %30 {strides = array<i32>} : memref<512x8xf32, #tpu.memory_space<vmem>>, vector<512x8xf32>,
    return
  }
  func.func @transform_0(%arg0: i32) -> (i32, i32) {
    %c0_i32 = arith.constant 0 : i32
    %c0_i32_0 = arith.constant 0 : i32
    return %arg0, %c0_i32 : i32, i32
  }
  func.func @transform_1(%arg0: i32) -> (i32, i32) {
    %c0_i32 = arith.constant 0 : i32
    %c0_i32_0 = arith.constant 0 : i32
    %c0_i32_1 = arith.constant 0 : i32
    return %c0_i32, %c0_i32_0 : i32, i32
  }
  func.func @transform_2(%arg0: i32) -> (i32, i32) {
    %c0_i32 = arith.constant 0 : i32
    %c0_i32_0 = arith.constant 0 : i32
    %c0_i32_1 = arith.constant 0 : i32
    return %c0_i32, %c0_i32_0 : i32, i32
  }
  func.func @transform_3(%arg0: i32) -> (i32, i32, i32) {
    %c0_i32 = arith.constant 0 : i32
    %c0_i32_0 = arith.constant 0 : i32
    %c0_i32_1 = arith.constant 0 : i32
    %c0_i32_2 = arith.constant 0 : i32
    return %c0_i32, %c0_i32_0, %c0_i32_1 : i32, i32, i32
  }
  func.func @transform_4(%arg0: i32) -> (i32, i32, i32) {
    %c0_i32 = arith.constant 0 : i32
    %c0_i32_0 = arith.constant 0 : i32
    %c0_i32_1 = arith.constant 0 : i32
    %c0_i32_2 = arith.constant 0 : i32
    return %c0_i32, %c0_i32_0, %c0_i32_1 : i32, i32, i32
  }
  func.func @transform_5(%arg0: i32) -> (i32, i32) {
    %c0_i32 = arith.constant 0 : i32
    %c0_i32_0 = arith.constant 0 : i32
    %c0_i32_1 = arith.constant 0 : i32
    return %c0_i32, %c0_i32_0 : i32, i32
  }
  func.func @transform_6(%arg0: i32) -> (i32, i32) {
    %c0_i32 = arith.constant 0 : i32
    %c0_i32_0 = arith.constant 0 : i32
    %c0_i32_1 = arith.constant 0 : i32
    return %c0_i32, %c0_i32_0 : i32, i32
  }
  func.func @transform_7(%arg0: i32) -> (i32, i32) {
    %c0_i32 = arith.constant 0 : i32
    %c0_i32_0 = arith.constant 0 : i32
    return %arg0, %c0_i32 : i32, i32
  }
}

</mosaic_0001>

<llo_original>
// kernel: tpu_custom_call.1
$region0: #{tpu_custom_call.1}
  #allocation0 [shape = 'u32[]', space=smem, size = 0x4, offset = 0x4, fixed_abs, tag = 'smem constant byte address 0x4 - core index']
  #allocation1 [shape = 'u32[144,128]{1,0:T(1,128)}', space=vmem, size = 0x12000, scoped, tag = 'internal scratch']
  %s0 = inlined_call_operand.vmem [shape: f32[512,16], index: 0, kind: input, shape index: {}]
  %s1 = inlined_call_operand.vmem [shape: f32[16,32], index: 1, kind: input, shape index: {}]
  %s2 = inlined_call_operand.vmem [shape: f32[1,32], index: 2, kind: input, shape index: {}]
  %s3 = inlined_call_operand.vmem [shape: f32[2,32,32], index: 3, kind: input, shape index: {}]
  %s4 = inlined_call_operand.vmem [shape: f32[2,1,32], index: 4, kind: input, shape index: {}]
  %s5 = inlined_call_operand.vmem [shape: f32[32,8], index: 5, kind: input, shape index: {}]
  %s6 = inlined_call_operand.vmem [shape: f32[1,8], index: 6, kind: input, shape index: {}]
  %s7 = inlined_call_operand.vmem [shape: f32[512,8], index: 7, kind: output, shape index: {}]
  %s8 = sld [smem:[#allocation0]]
  $region38: #{tpu_custom_call.1} parent=0
    _
  %s10 = ssub.s32 1, %s8
  %s11 = scalar_select 0, %s10, %s8
  // Predicated region
  $region2: #{tpu_custom_call.1} parent=0 // pred_check
    _
  $region3: #{tpu_custom_call.1} parent=0 // pred_check_branch
    %13 = sbr.rel (0) target = $region5
  $region4: #{tpu_custom_call.1} parent=0 // pred_region
    _
  $region5: #{tpu_custom_call.1} parent=0 // pred_fallthru
    _
  // Predicated region
  $region6: #{tpu_custom_call.1} parent=0 // pred_check
    _
  $region7: #{tpu_custom_call.1} parent=0 // pred_check_branch
    %15 = sbr.rel (0) target = $region9
  $region8: #{tpu_custom_call.1} parent=0 // pred_region
    _
  $region9: #{tpu_custom_call.1} parent=0 // pred_fallthru
    _
  // Predicated region
  $region10: #{tpu_custom_call.1} parent=0 // pred_check
    _
  $region11: #{tpu_custom_call.1} parent=0 // pred_check_branch
    %17 = sbr.rel (0) target = $region13
  $region12: #{tpu_custom_call.1} parent=0 // pred_region
    _
  $region13: #{tpu_custom_call.1} parent=0 // pred_fallthru
    _
  // Predicated region
  $region14: #{tpu_custom_call.1} parent=0 // pred_check
    _
  $region15: #{tpu_custom_call.1} parent=0 // pred_check_branch
    %19 = sbr.rel (0) target = $region17
  $region16: #{tpu_custom_call.1} parent=0 // pred_region
    _
  $region17: #{tpu_custom_call.1} parent=0 // pred_fallthru
    _
  // Predicated region
  $region18: #{tpu_custom_call.1} parent=0 // pred_check
    _
  $region19: #{tpu_custom_call.1} parent=0 // pred_check_branch
    %21 = sbr.rel (0) target = $region21
  $region20: #{tpu_custom_call.1} parent=0 // pred_region
    _
  $region21: #{tpu_custom_call.1} parent=0 // pred_fallthru
    _
  // Predicated region
  $region22: #{tpu_custom_call.1} parent=0 // pred_check
    _
  $region23: #{tpu_custom_call.1} parent=0 // pred_check_branch
    %23 = sbr.rel (0) target = $region25
  $region24: #{tpu_custom_call.1} parent=0 // pred_region
    _
  $region25: #{tpu_custom_call.1} parent=0 // pred_fallthru
    _
  // Predicated region
  $region26: #{tpu_custom_call.1} parent=0 // pred_check
    _
  $region27: #{tpu_custom_call.1} parent=0 // pred_check_branch
    %25 = sbr.rel (0) target = $region29
  $region28: #{tpu_custom_call.1} parent=0 // pred_region
    _
  $region29: #{tpu_custom_call.1} parent=0 // pred_fallthru
    _
  %v26 = vld [vmem:[%s0] sm:$0xff]
  %v27 = vld [vmem:[%s0 + $0x8] sm:$0xff]
  %v28 = vld [vmem:[%s0 + $0x10] sm:$0xff]
  %v29 = vld [vmem:[%s0 + $0x18] sm:$0xff]
  %v30 = vld [vmem:[%s0 + $0x20] sm:$0xff]
  %v31 = vld [vmem:[%s0 + $0x28] sm:$0xff]
  %v32 = vld [vmem:[%s0 + $0x30] sm:$0xff]
  %v33 = vld [vmem:[%s0 + $0x38] sm:$0xff]
  %v34 = vld [vmem:[%s0 + $0x40] sm:$0xff]
  %v35 = vld [vmem:[%s0 + $0x48] sm:$0xff]
  %v36 = vld [vmem:[%s0 + $0x50] sm:$0xff]
  %v37 = vld [vmem:[%s0 + $0x58] sm:$0xff]
  %v38 = vld [vmem:[%s0 + $0x60] sm:$0xff]
  %v39 = vld [vmem:[%s0 + $0x68] sm:$0xff]
  %v40 = vld [vmem:[%s0 + $0x70] sm:$0xff]
  %v41 = vld [vmem:[%s0 + $0x78] sm:$0xff]
  %v42 = vld [vmem:[%s0 + $0x80] sm:$0xff]
  %v43 = vld [vmem:[%s0 + $0x88] sm:$0xff]
  %v44 = vld [vmem:[%s0 + $0x90] sm:$0xff]
  %v45 = vld [vmem:[%s0 + $0x98] sm:$0xff]
  %v46 = vld [vmem:[%s0 + $0xa0] sm:$0xff]
  %v47 = vld [vmem:[%s0 + $0xa8] sm:$0xff]
  %v48 = vld [vmem:[%s0 + $0xb0] sm:$0xff]
  %v49 = vld [vmem:[%s0 + $0xb8] sm:$0xff]
  %v50 = vld [vmem:[%s0 + $0xc0] sm:$0xff]
  %v51 = vld [vmem:[%s0 + $0xc8] sm:$0xff]
  %v52 = vld [vmem:[%s0 + $0xd0] sm:$0xff]
  %v53 = vld [vmem:[%s0 + $0xd8] sm:$0xff]
  %v54 = vld [vmem:[%s0 + $0xe0] sm:$0xff]
  %v55 = vld [vmem:[%s0 + $0xe8] sm:$0xff]
  %v56 = vld [vmem:[%s0 + $0xf0] sm:$0xff]
  %v57 = vld [vmem:[%s0 + $0xf8] sm:$0xff]
  %v58 = vld [vmem:[%s0 + $0x100] sm:$0xff]
  %v59 = vld [vmem:[%s0 + $0x108] sm:$0xff]
  %v60 = vld [vmem:[%s0 + $0x110] sm:$0xff]
  %v61 = vld [vmem:[%s0 + $0x118] sm:$0xff]
  %v62 = vld [vmem:[%s0 + $0x120] sm:$0xff]
  %v63 = vld [vmem:[%s0 + $0x128] sm:$0xff]
  %v64 = vld [vmem:[%s0 + $0x130] sm:$0xff]
  %v65 = vld [vmem:[%s0 + $0x138] sm:$0xff]
  %v66 = vld [vmem:[%s0 + $0x140] sm:$0xff]
  %v67 = vld [vmem:[%s0 + $0x148] sm:$0xff]
  %v68 = vld [vmem:[%s0 + $0x150] sm:$0xff]
  %v69 = vld [vmem:[%s0 + $0x158] sm:$0xff]
  %v70 = vld [vmem:[%s0 + $0x160] sm:$0xff]
  %v71 = vld [vmem:[%s0 + $0x168] sm:$0xff]
  %v72 = vld [vmem:[%s0 + $0x170] sm:$0xff]
  %v73 = vld [vmem:[%s0 + $0x178] sm:$0xff]
  %v74 = vld [vmem:[%s0 + $0x180] sm:$0xff]
  %v75 = vld [vmem:[%s0 + $0x188] sm:$0xff]
  %v76 = vld [vmem:[%s0 + $0x190] sm:$0xff]
  %v77 = vld [vmem:[%s0 + $0x198] sm:$0xff]
  %v78 = vld [vmem:[%s0 + $0x1a0] sm:$0xff]
  %v79 = vld [vmem:[%s0 + $0x1a8] sm:$0xff]
  %v80 = vld [vmem:[%s0 + $0x1b0] sm:$0xff]
  %v81 = vld [vmem:[%s0 + $0x1b8] sm:$0xff]
  %v82 = vld [vmem:[%s0 + $0x1c0] sm:$0xff]
  %v83 = vld [vmem:[%s0 + $0x1c8] sm:$0xff]
  %v84 = vld [vmem:[%s0 + $0x1d0] sm:$0xff]
  %v85 = vld [vmem:[%s0 + $0x1d8] sm:$0xff]
  %v86 = vld [vmem:[%s0 + $0x1e0] sm:$0xff]
  %v87 = vld [vmem:[%s0 + $0x1e8] sm:$0xff]
  %v88 = vld [vmem:[%s0 + $0x1f0] sm:$0xff]
  %v89 = vld [vmem:[%s0 + $0x1f8] sm:$0xff]
  %v90 = vld [vmem:[%s1] sm:$0xff]
  %v91 = vld [vmem:[%s1 + $0x8] sm:$0xff]
  %v92 = vld [vmem:[%s2] sm:$0x1]
  %v94 = vlaneseq
  %v95 = vshrl.u32 %v94, 7
  %v96 = vsub.s32 0, %v95
  %v97 = vrot.slane %v92, %v96
  %vm99 = vcmask 130048
  %v101 = vsel %vm99, %v26, 0
  %v104 = vsel %vm99, %v27, 0
  %v107 = vsel %vm99, %v28, 0
  %v110 = vsel %vm99, %v29, 0
  %v113 = vsel %vm99, %v30, 0
  %v116 = vsel %vm99, %v31, 0
  %v119 = vsel %vm99, %v32, 0
  %v122 = vsel %vm99, %v33, 0
  %v125 = vsel %vm99, %v34, 0
  %v128 = vsel %vm99, %v35, 0
  %v131 = vsel %vm99, %v36, 0
  %v134 = vsel %vm99, %v37, 0
  %v137 = vsel %vm99, %v38, 0
  %v140 = vsel %vm99, %v39, 0
  %v143 = vsel %vm99, %v40, 0
  %v146 = vsel %vm99, %v41, 0
  %v149 = vsel %vm99, %v42, 0
  %v152 = vsel %vm99, %v43, 0
  %v155 = vsel %vm99, %v44, 0
  %v158 = vsel %vm99, %v45, 0
  %v161 = vsel %vm99, %v46, 0
  %v164 = vsel %vm99, %v47, 0
  %v167 = vsel %vm99, %v48, 0
  %v170 = vsel %vm99, %v49, 0
  %v173 = vsel %vm99, %v50, 0
  %v176 = vsel %vm99, %v51, 0
  %v179 = vsel %vm99, %v52, 0
  %v182 = vsel %vm99, %v53, 0
  %v185 = vsel %vm99, %v54, 0
  %v188 = vsel %vm99, %v55, 0
  %v191 = vsel %vm99, %v56, 0
  %v194 = vsel %vm99, %v57, 0
  %v197 = vsel %vm99, %v58, 0
  %v200 = vsel %vm99, %v59, 0
  %v203 = vsel %vm99, %v60, 0
  %v206 = vsel %vm99, %v61, 0
  %v209 = vsel %vm99, %v62, 0
  %v212 = vsel %vm99, %v63, 0
  %v215 = vsel %vm99, %v64, 0
  %v218 = vsel %vm99, %v65, 0
  %v221 = vsel %vm99, %v66, 0
  %v224 = vsel %vm99, %v67, 0
  %v227 = vsel %vm99, %v68, 0
  %v230 = vsel %vm99, %v69, 0
  %v233 = vsel %vm99, %v70, 0
  %v236 = vsel %vm99, %v71, 0
  %v239 = vsel %vm99, %v72, 0
  %v242 = vsel %vm99, %v73, 0
  %v245 = vsel %vm99, %v74, 0
  %v248 = vsel %vm99, %v75, 0
  %v251 = vsel %vm99, %v76, 0
  %v254 = vsel %vm99, %v77, 0
  %v257 = vsel %vm99, %v78, 0
  %v260 = vsel %vm99, %v79, 0
  %v263 = vsel %vm99, %v80, 0
  %v266 = vsel %vm99, %v81, 0
  %v269 = vsel %vm99, %v82, 0
  %v272 = vsel %vm99, %v83, 0
  %v275 = vsel %vm99, %v84, 0
  %v278 = vsel %vm99, %v85, 0
  %v281 = vsel %vm99, %v86, 0
  %v284 = vsel %vm99, %v87, 0
  %v287 = vsel %vm99, %v88, 0
  %v290 = vsel %vm99, %v89, 0
  %292 = vmatprep.subr.mxu0 0.0
  %293 = vmatpush1.msra.mxu0 0.0
  %294 = vmatprep.subr.mxu0 0.0
  %295 = vmatpush1.msra.mxu0 0.0
  %296 = vmatprep.subr.mxu0 0.0
  %297 = vmatpush1.msra.mxu0 0.0
  %298 = vmatprep.subr.mxu0 0.0
  %299 = vmatpush1.msra.mxu0 0.0
  %300 = vmatprep.subr.mxu0 0.0
  %301 = vmatpush1.msra.mxu0 0.0
  %302 = vmatprep.subr.mxu0 0.0
  %303 = vmatpush1.msra.mxu0 0.0
  %304 = vmatprep.subr.mxu0 0.0
  %305 = vmatpush1.msra.mxu0 0.0
  %306 = vmatprep.subr.mxu0 0.0
  %307 = vmatpush1.msra.mxu0 0.0
  %308 = vmatprep.subr.mxu0 0.0
  %309 = vmatpush1.msra.mxu0 0.0
  %310 = vmatprep.subr.mxu0 0.0
  %311 = vmatpush1.msra.mxu0 0.0
  %312 = vmatprep.subr.mxu0 0.0
  %313 = vmatpush1.msra.mxu0 0.0
  %314 = vmatprep.subr.mxu0 0.0
  %315 = vmatpush1.msra.mxu0 0.0
  %316 = vmatprep.subr.mxu0 0.0
  %317 = vmatpush1.msra.mxu0 0.0
  %318 = vmatprep.subr.mxu0 0.0
  %319 = vmatpush1.msra.mxu0 0.0
  %320 = vmatprep.subr.mxu0 0.0
  %321 = vmatpush1.msra.mxu0 %v91
  %322 = vmatprep.subr.mxu0 0.0
  %323 = vmatpush1.msra.mxu0 %v90
  %324 = vmatprep.subr.mxu0 0.0
  %325 = vmatpush2.msra.mxu0 0.0
  %326 = vmatprep.subr.mxu0 0.0
  %327 = vmatpush2.msra.mxu0 0.0
  %328 = vmatprep.subr.mxu0 0.0
  %329 = vmatpush2.msra.mxu0 0.0
  %330 = vmatprep.subr.mxu0 0.0
  %331 = vmatpush2.msra.mxu0 0.0
  %332 = vmatprep.subr.mxu0 0.0
  %333 = vmatpush2.msra.mxu0 0.0
  %334 = vmatprep.subr.mxu0 0.0
  %335 = vmatpush2.msra.mxu0 0.0
  %336 = vmatprep.subr.mxu0 0.0
  %337 = vmatpush2.msra.mxu0 0.0
  %338 = vmatprep.subr.mxu0 0.0
  %339 = vmatpush2.msra.mxu0 0.0
  %340 = vmatprep.subr.mxu0 0.0
  %341 = vmatpush2.msra.mxu0 0.0
  %342 = vmatprep.subr.mxu0 0.0
  %343 = vmatpush2.msra.mxu0 0.0
  %344 = vmatprep.subr.mxu0 0.0
  %345 = vmatpush2.msra.mxu0 0.0
  %346 = vmatprep.subr.mxu0 0.0
  %347 = vmatpush2.msra.mxu0 0.0
  %348 = vmatprep.subr.mxu0 0.0
  %349 = vmatpush2.msra.mxu0 0.0
  %350 = vmatprep.subr.mxu0 0.0
  %351 = vmatpush2.msra.mxu0 0.0
  %352 = vmatprep.subr.mxu0 0.0
  %353 = vmatpush2.msra.mxu0 0.0
  %354 = vmatprep.subr.mxu0 0.0
  %355 = vmatpush2.msra.mxu0 0.0
  %356 = vmatprep.mubr.f32.mxu0 0.0
  %357 = vmatmul.mubr.f32.gmra.mxu0 %v101
  %v358 = vpop.f32.mrf.mxu0
  %v359 = vadd.f32 %v97, %v358
  %v360 = vpop.f32.mrf.mxu0
  %361 = vmatprep.mubr.f32.mxu0 0.0
  %362 = vmatmul.mubr.f32.gmra.mxu0 %v104
  %v363 = vpop.f32.mrf.mxu0
  %v364 = vadd.f32 %v97, %v363
  %v365 = vpop.f32.mrf.mxu0
  %366 = vmatprep.mubr.f32.mxu0 0.0
  %367 = vmatmul.mubr.f32.gmra.mxu0 %v107
  %v368 = vpop.f32.mrf.mxu0
  %v369 = vadd.f32 %v97, %v368
  %v370 = vpop.f32.mrf.mxu0
  %371 = vmatprep.mubr.f32.mxu0 0.0
  %372 = vmatmul.mubr.f32.gmra.mxu0 %v110
  %v373 = vpop.f32.mrf.mxu0
  %v374 = vadd.f32 %v97, %v373
  %v375 = vpop.f32.mrf.mxu0
  %376 = vmatprep.mubr.f32.mxu0 0.0
  %377 = vmatmul.mubr.f32.gmra.mxu0 %v113
  %v378 = vpop.f32.mrf.mxu0
  %v379 = vadd.f32 %v97, %v378
  %v380 = vpop.f32.mrf.mxu0
  %381 = vmatprep.mubr.f32.mxu0 0.0
  %382 = vmatmul.mubr.f32.gmra.mxu0 %v116
  %v383 = vpop.f32.mrf.mxu0
  %v384 = vadd.f32 %v97, %v383
  %v385 = vpop.f32.mrf.mxu0
  %386 = vmatprep.mubr.f32.mxu0 0.0
  %387 = vmatmul.mubr.f32.gmra.mxu0 %v119
  %v388 = vpop.f32.mrf.mxu0
  %v389 = vadd.f32 %v97, %v388
  %v390 = vpop.f32.mrf.mxu0
  %391 = vmatprep.mubr.f32.mxu0 0.0
  %392 = vmatmul.mubr.f32.gmra.mxu0 %v122
  %v393 = vpop.f32.mrf.mxu0
  %v394 = vadd.f32 %v97, %v393
  %v395 = vpop.f32.mrf.mxu0
  %396 = vmatprep.mubr.f32.mxu0 0.0
  %397 = vmatmul.mubr.f32.gmra.mxu0 %v125
  %v398 = vpop.f32.mrf.mxu0
  %v399 = vadd.f32 %v97, %v398
  %v400 = vpop.f32.mrf.mxu0
  %401 = vmatprep.mubr.f32.mxu0 0.0
  %402 = vmatmul.mubr.f32.gmra.mxu0 %v128
  %v403 = vpop.f32.mrf.mxu0
  %v404 = vadd.f32 %v97, %v403
  %v405 = vpop.f32.mrf.mxu0
  %406 = vmatprep.mubr.f32.mxu0 0.0
  %407 = vmatmul.mubr.f32.gmra.mxu0 %v131
  %v408 = vpop.f32.mrf.mxu0
  %v409 = vadd.f32 %v97, %v408
  %v410 = vpop.f32.mrf.mxu0
  %411 = vmatprep.mubr.f32.mxu0 0.0
  %412 = vmatmul.mubr.f32.gmra.mxu0 %v134
  %v413 = vpop.f32.mrf.mxu0
  %v414 = vadd.f32 %v97, %v413
  %v415 = vpop.f32.mrf.mxu0
  %416 = vmatprep.mubr.f32.mxu0 0.0
  %417 = vmatmul.mubr.f32.gmra.mxu0 %v137
  %v418 = vpop.f32.mrf.mxu0
  %v419 = vadd.f32 %v97, %v418
  %v420 = vpop.f32.mrf.mxu0
  %421 = vmatprep.mubr.f32.mxu0 0.0
  %422 = vmatmul.mubr.f32.gmra.mxu0 %v140
  %v423 = vpop.f32.mrf.mxu0
  %v424 = vadd.f32 %v97, %v423
  %v425 = vpop.f32.mrf.mxu0
  %426 = vmatprep.mubr.f32.mxu0 0.0
  %427 = vmatmul.mubr.f32.gmra.mxu0 %v143
  %v428 = vpop.f32.mrf.mxu0
  %v429 = vadd.f32 %v97, %v428
  %v430 = vpop.f32.mrf.mxu0
  %431 = vmatprep.mubr.f32.mxu0 0.0
  %432 = vmatmul.mubr.f32.gmra.mxu0 %v146
  %v433 = vpop.f32.mrf.mxu0
  %v434 = vadd.f32 %v97, %v433
  %v435 = vpop.f32.mrf.mxu0
  %436 = vmatprep.mubr.f32.mxu0 0.0
  %437 = vmatmul.mubr.f32.gmra.mxu0 %v149
  %v438 = vpop.f32.mrf.mxu0
  %v439 = vadd.f32 %v97, %v438
  %v440 = vpop.f32.mrf.mxu0
  %441 = vmatprep.mubr.f32.mxu0 0.0
  %442 = vmatmul.mubr.f32.gmra.mxu0 %v152
  %v443 = vpop.f32.mrf.mxu0
  %v444 = vadd.f32 %v97, %v443
  %v445 = vpop.f32.mrf.mxu0
  %446 = vmatprep.mubr.f32.mxu0 0.0
  %447 = vmatmul.mubr.f32.gmra.mxu0 %v155
  %v448 = vpop.f32.mrf.mxu0
  %v449 = vadd.f32 %v97, %v448
  %v450 = vpop.f32.mrf.mxu0
  %451 = vmatprep.mubr.f32.mxu0 0.0
  %452 = vmatmul.mubr.f32.gmra.mxu0 %v158
  %v453 = vpop.f32.mrf.mxu0
  %v454 = vadd.f32 %v97, %v453
  %v455 = vpop.f32.mrf.mxu0
  %456 = vmatprep.mubr.f32.mxu0 0.0
  %457 = vmatmul.mubr.f32.gmra.mxu0 %v161
  %v458 = vpop.f32.mrf.mxu0
  %v459 = vadd.f32 %v97, %v458
  %v460 = vpop.f32.mrf.mxu0
  %461 = vmatprep.mubr.f32.mxu0 0.0
  %462 = vmatmul.mubr.f32.gmra.mxu0 %v164
  %v463 = vpop.f32.mrf.mxu0
  %v464 = vadd.f32 %v97, %v463
  %v465 = vpop.f32.mrf.mxu0
  %466 = vmatprep.mubr.f32.mxu0 0.0
  %467 = vmatmul.mubr.f32.gmra.mxu0 %v167
  %v468 = vpop.f32.mrf.mxu0
  %v469 = vadd.f32 %v97, %v468
  %v470 = vpop.f32.mrf.mxu0
  %471 = vmatprep.mubr.f32.mxu0 0.0
  %472 = vmatmul.mubr.f32.gmra.mxu0 %v170
  %v473 = vpop.f32.mrf.mxu0
  %v474 = vadd.f32 %v97, %v473
  %v475 = vpop.f32.mrf.mxu0
  %476 = vmatprep.mubr.f32.mxu0 0.0
  %477 = vmatmul.mubr.f32.gmra.mxu0 %v173
  %v478 = vpop.f32.mrf.mxu0
  %v479 = vadd.f32 %v97, %v478
  %v480 = vpop.f32.mrf.mxu0
  %481 = vmatprep.mubr.f32.mxu0 0.0
  %482 = vmatmul.mubr.f32.gmra.mxu0 %v176
  %v483 = vpop.f32.mrf.mxu0
  %v484 = vadd.f32 %v97, %v483
  %v485 = vpop.f32.mrf.mxu0
  %486 = vmatprep.mubr.f32.mxu0 0.0
  %487 = vmatmul.mubr.f32.gmra.mxu0 %v179
  %v488 = vpop.f32.mrf.mxu0
  %v489 = vadd.f32 %v97, %v488
  %v490 = vpop.f32.mrf.mxu0
  %491 = vmatprep.mubr.f32.mxu0 0.0
  %492 = vmatmul.mubr.f32.gmra.mxu0 %v182
  %v493 = vpop.f32.mrf.mxu0
  %v494 = vadd.f32 %v97, %v493
  %v495 = vpop.f32.mrf.mxu0
  %496 = vmatprep.mubr.f32.mxu0 0.0
  %497 = vmatmul.mubr.f32.gmra.mxu0 %v185
  %v498 = vpop.f32.mrf.mxu0
  %v499 = vadd.f32 %v97, %v498
  %v500 = vpop.f32.mrf.mxu0
  %501 = vmatprep.mubr.f32.mxu0 0.0
  %502 = vmatmul.mubr.f32.gmra.mxu0 %v188
  %v503 = vpop.f32.mrf.mxu0
  %v504 = vadd.f32 %v97, %v503
  %v505 = vpop.f32.mrf.mxu0
  %506 = vmatprep.mubr.f32.mxu0 0.0
  %507 = vmatmul.mubr.f32.gmra.mxu0 %v191
  %v508 = vpop.f32.mrf.mxu0
  %v509 = vadd.f32 %v97, %v508
  %v510 = vpop.f32.mrf.mxu0
  %511 = vmatprep.mubr.f32.mxu0 0.0
  %512 = vmatmul.mubr.f32.gmra.mxu0 %v194
  %v513 = vpop.f32.mrf.mxu0
  %v514 = vadd.f32 %v97, %v513
  %v515 = vpop.f32.mrf.mxu0
  %516 = vmatprep.mubr.f32.mxu0 0.0
  %517 = vmatmul.mubr.f32.gmra.mxu0 %v197
  %v518 = vpop.f32.mrf.mxu0
  %v519 = vadd.f32 %v97, %v518
  %v520 = vpop.f32.mrf.mxu0
  %521 = vmatprep.mubr.f32.mxu0 0.0
  %522 = vmatmul.mubr.f32.gmra.mxu0 %v200
  %v523 = vpop.f32.mrf.mxu0
  %v524 = vadd.f32 %v97, %v523
  %v525 = vpop.f32.mrf.mxu0
  %526 = vmatprep.mubr.f32.mxu0 0.0
  %527 = vmatmul.mubr.f32.gmra.mxu0 %v203
  %v528 = vpop.f32.mrf.mxu0
  %v529 = vadd.f32 %v97, %v528
  %v530 = vpop.f32.mrf.mxu0
  %531 = vmatprep.mubr.f32.mxu0 0.0
  %532 = vmatmul.mubr.f32.gmra.mxu0 %v206
  %v533 = vpop.f32.mrf.mxu0
  %v534 = vadd.f32 %v97, %v533
  %v535 = vpop.f32.mrf.mxu0
  %536 = vmatprep.mubr.f32.mxu0 0.0
  %537 = vmatmul.mubr.f32.gmra.mxu0 %v209
  %v538 = vpop.f32.mrf.mxu0
  %v539 = vadd.f32 %v97, %v538
  %v540 = vpop.f32.mrf.mxu0
  %541 = vmatprep.mubr.f32.mxu0 0.0
  %542 = vmatmul.mubr.f32.gmra.mxu0 %v212
  %v543 = vpop.f32.mrf.mxu0
  %v544 = vadd.f32 %v97, %v543
  %v545 = vpop.f32.mrf.mxu0
  %546 = vmatprep.mubr.f32.mxu0 0.0
  %547 = vmatmul.mubr.f32.gmra.mxu0 %v215
  %v548 = vpop.f32.mrf.mxu0
  %v549 = vadd.f32 %v97, %v548
  %v550 = vpop.f32.mrf.mxu0
  %551 = vmatprep.mubr.f32.mxu0 0.0
  %552 = vmatmul.mubr.f32.gmra.mxu0 %v218
  %v553 = vpop.f32.mrf.mxu0
  %v554 = vadd.f32 %v97, %v553
  %v555 = vpop.f32.mrf.mxu0
  %556 = vmatprep.mubr.f32.mxu0 0.0
  %557 = vmatmul.mubr.f32.gmra.mxu0 %v221
  %v558 = vpop.f32.mrf.mxu0
  %v559 = vadd.f32 %v97, %v558
  %v560 = vpop.f32.mrf.mxu0
  %561 = vmatprep.mubr.f32.mxu0 0.0
  %562 = vmatmul.mubr.f32.gmra.mxu0 %v224
  %v563 = vpop.f32.mrf.mxu0
  %v564 = vadd.f32 %v97, %v563
  %v565 = vpop.f32.mrf.mxu0
  %566 = vmatprep.mubr.f32.mxu0 0.0
  %567 = vmatmul.mubr.f32.gmra.mxu0 %v227
  %v568 = vpop.f32.mrf.mxu0
  %v569 = vadd.f32 %v97, %v568
  %v570 = vpop.f32.mrf.mxu0
  %571 = vmatprep.mubr.f32.mxu0 0.0
  %572 = vmatmul.mubr.f32.gmra.mxu0 %v230
  %v573 = vpop.f32.mrf.mxu0
  %v574 = vadd.f32 %v97, %v573
  %v575 = vpop.f32.mrf.mxu0
  %576 = vmatprep.mubr.f32.mxu0 0.0
  %577 = vmatmul.mubr.f32.gmra.mxu0 %v233
  %v578 = vpop.f32.mrf.mxu0
  %v579 = vadd.f32 %v97, %v578
  %v580 = vpop.f32.mrf.mxu0
  %581 = vmatprep.mubr.f32.mxu0 0.0
  %582 = vmatmul.mubr.f32.gmra.mxu0 %v236
  %v583 = vpop.f32.mrf.mxu0
  %v584 = vadd.f32 %v97, %v583
  %v585 = vpop.f32.mrf.mxu0
  %586 = vmatprep.mubr.f32.mxu0 0.0
  %587 = vmatmul.mubr.f32.gmra.mxu0 %v239
  %v588 = vpop.f32.mrf.mxu0
  %v589 = vadd.f32 %v97, %v588
  %v590 = vpop.f32.mrf.mxu0
  %591 = vmatprep.mubr.f32.mxu0 0.0
  %592 = vmatmul.mubr.f32.gmra.mxu0 %v242
  %v593 = vpop.f32.mrf.mxu0
  %v594 = vadd.f32 %v97, %v593
  %v595 = vpop.f32.mrf.mxu0
  %596 = vmatprep.mubr.f32.mxu0 0.0
  %597 = vmatmul.mubr.f32.gmra.mxu0 %v245
  %v598 = vpop.f32.mrf.mxu0
  %v599 = vadd.f32 %v97, %v598
  %v600 = vpop.f32.mrf.mxu0
  %601 = vmatprep.mubr.f32.mxu0 0.0
  %602 = vmatmul.mubr.f32.gmra.mxu0 %v248
  %v603 = vpop.f32.mrf.mxu0
  %v604 = vadd.f32 %v97, %v603
  %v605 = vpop.f32.mrf.mxu0
  %606 = vmatprep.mubr.f32.mxu0 0.0
  %607 = vmatmul.mubr.f32.gmra.mxu0 %v251
  %v608 = vpop.f32.mrf.mxu0
  %v609 = vadd.f32 %v97, %v608
  %v610 = vpop.f32.mrf.mxu0
  %611 = vmatprep.mubr.f32.mxu0 0.0
  %612 = vmatmul.mubr.f32.gmra.mxu0 %v254
  %v613 = vpop.f32.mrf.mxu0
  %v614 = vadd.f32 %v97, %v613
  %v615 = vpop.f32.mrf.mxu0
  %616 = vmatprep.mubr.f32.mxu0 0.0
  %617 = vmatmul.mubr.f32.gmra.mxu0 %v257
  %v618 = vpop.f32.mrf.mxu0
  %v619 = vadd.f32 %v97, %v618
  %v620 = vpop.f32.mrf.mxu0
  %621 = vmatprep.mubr.f32.mxu0 0.0
  %622 = vmatmul.mubr.f32.gmra.mxu0 %v260
  %v623 = vpop.f32.mrf.mxu0
  %v624 = vadd.f32 %v97, %v623
  %v625 = vpop.f32.mrf.mxu0
  %626 = vmatprep.mubr.f32.mxu0 0.0
  %627 = vmatmul.mubr.f32.gmra.mxu0 %v263
  %v628 = vpop.f32.mrf.mxu0
  %v629 = vadd.f32 %v97, %v628
  %v630 = vpop.f32.mrf.mxu0
  %631 = vmatprep.mubr.f32.mxu0 0.0
  %632 = vmatmul.mubr.f32.gmra.mxu0 %v266
  %v633 = vpop.f32.mrf.mxu0
  %v634 = vadd.f32 %v97, %v633
  %v635 = vpop.f32.mrf.mxu0
  %636 = vmatprep.mubr.f32.mxu0 0.0
  %637 = vmatmul.mubr.f32.gmra.mxu0 %v269
  %v638 = vpop.f32.mrf.mxu0
  %v639 = vadd.f32 %v97, %v638
  %v640 = vpop.f32.mrf.mxu0
  %641 = vmatprep.mubr.f32.mxu0 0.0
  %642 = vmatmul.mubr.f32.gmra.mxu0 %v272
  %v643 = vpop.f32.mrf.mxu0
  %v644 = vadd.f32 %v97, %v643
  %v645 = vpop.f32.mrf.mxu0
  %646 = vmatprep.mubr.f32.mxu0 0.0
  %647 = vmatmul.mubr.f32.gmra.mxu0 %v275
  %v648 = vpop.f32.mrf.mxu0
  %v649 = vadd.f32 %v97, %v648
  %v650 = vpop.f32.mrf.mxu0
  %651 = vmatprep.mubr.f32.mxu0 0.0
  %652 = vmatmul.mubr.f32.gmra.mxu0 %v278
  %v653 = vpop.f32.mrf.mxu0
  %v654 = vadd.f32 %v97, %v653
  %v655 = vpop.f32.mrf.mxu0
  %656 = vmatprep.mubr.f32.mxu0 0.0
  %657 = vmatmul.mubr.f32.gmra.mxu0 %v281
  %v658 = vpop.f32.mrf.mxu0
  %v659 = vadd.f32 %v97, %v658
  %v660 = vpop.f32.mrf.mxu0
  %661 = vmatprep.mubr.f32.mxu0 0.0
  %662 = vmatmul.mubr.f32.gmra.mxu0 %v284
  %v663 = vpop.f32.mrf.mxu0
  %v664 = vadd.f32 %v97, %v663
  %v665 = vpop.f32.mrf.mxu0
  %666 = vmatprep.mubr.f32.mxu0 0.0
  %667 = vmatmul.mubr.f32.gmra.mxu0 %v287
  %v668 = vpop.f32.mrf.mxu0
  %v669 = vadd.f32 %v97, %v668
  %v670 = vpop.f32.mrf.mxu0
  %671 = vmatprep.mubr.f32.mxu0 0.0
  %672 = vmatmul.mubr.f32.gmra.mxu0 %v290
  %v673 = vpop.f32.mrf.mxu0
  %v674 = vadd.f32 %v97, %v673
  %v675 = vpop.f32.mrf.mxu0
  %676 = vdwg.mxu0
  %v677 = vmax.f32 %v359, 0.0
  %v678 = vmax.f32 %v364, 0.0
  %v679 = vmax.f32 %v369, 0.0
  %v680 = vmax.f32 %v374, 0.0
  %v681 = vmax.f32 %v379, 0.0
  %v682 = vmax.f32 %v384, 0.0
  %v683 = vmax.f32 %v389, 0.0
  %v684 = vmax.f32 %v394, 0.0
  %v685 = vmax.f32 %v399, 0.0
  %v686 = vmax.f32 %v404, 0.0
  %v687 = vmax.f32 %v409, 0.0
  %v688 = vmax.f32 %v414, 0.0
  %v689 = vmax.f32 %v419, 0.0
  %v690 = vmax.f32 %v424, 0.0
  %v691 = vmax.f32 %v429, 0.0
  %v692 = vmax.f32 %v434, 0.0
  %v693 = vmax.f32 %v439, 0.0
  %v694 = vmax.f32 %v444, 0.0
  %v695 = vmax.f32 %v449, 0.0
  %v696 = vmax.f32 %v454, 0.0
  %v697 = vmax.f32 %v459, 0.0
  %v698 = vmax.f32 %v464, 0.0
  %v699 = vmax.f32 %v469, 0.0
  %v700 = vmax.f32 %v474, 0.0
  %v701 = vmax.f32 %v479, 0.0
  %v702 = vmax.f32 %v484, 0.0
  %v703 = vmax.f32 %v489, 0.0
  %v704 = vmax.f32 %v494, 0.0
  %v705 = vmax.f32 %v499, 0.0
  %v706 = vmax.f32 %v504, 0.0
  %v707 = vmax.f32 %v509, 0.0
  %v708 = vmax.f32 %v514, 0.0
  %v709 = vmax.f32 %v519, 0.0
  %v710 = vmax.f32 %v524, 0.0
  %v711 = vmax.f32 %v529, 0.0
  %v712 = vmax.f32 %v534, 0.0
  %v713 = vmax.f32 %v539, 0.0
  %v714 = vmax.f32 %v544, 0.0
  %v715 = vmax.f32 %v549, 0.0
  %v716 = vmax.f32 %v554, 0.0
  %v717 = vmax.f32 %v559, 0.0
  %v718 = vmax.f32 %v564, 0.0
  %v719 = vmax.f32 %v569, 0.0
  %v720 = vmax.f32 %v574, 0.0
  %v721 = vmax.f32 %v579, 0.0
  %v722 = vmax.f32 %v584, 0.0
  %v723 = vmax.f32 %v589, 0.0
  %v724 = vmax.f32 %v594, 0.0
  %v725 = vmax.f32 %v599, 0.0
  %v726 = vmax.f32 %v604, 0.0
  %v727 = vmax.f32 %v609, 0.0
  %v728 = vmax.f32 %v614, 0.0
  %v729 = vmax.f32 %v619, 0.0
  %v730 = vmax.f32 %v624, 0.0
  %v731 = vmax.f32 %v629, 0.0
  %v732 = vmax.f32 %v634, 0.0
  %v733 = vmax.f32 %v639, 0.0
  %v734 = vmax.f32 %v644, 0.0
  %v735 = vmax.f32 %v649, 0.0
  %v736 = vmax.f32 %v654, 0.0
  %v737 = vmax.f32 %v659, 0.0
  %v738 = vmax.f32 %v664, 0.0
  %v739 = vmax.f32 %v669, 0.0
  %v740 = vmax.f32 %v674, 0.0
  %v741 = vld [vmem:[%s3] sm:$0xff]
  %v742 = vld [vmem:[%s3 + $0x8] sm:$0xff]
  %v743 = vld [vmem:[%s3 + $0x10] sm:$0xff]
  %v744 = vld [vmem:[%s3 + $0x18] sm:$0xff]
  %v745 = vld [vmem:[%s4] sm:$0x1]
  %v747 = vlaneseq
  %v748 = vshrl.u32 %v747, 7
  %v749 = vsub.s32 0, %v748
  %v750 = vrot.slane %v745, %v749
  %vm752 = vcmask 261120
  %v754 = vsel %vm752, %v677, 0
  %v757 = vsel %vm752, %v678, 0
  %v760 = vsel %vm752, %v679, 0
  %v763 = vsel %vm752, %v680, 0
  %v766 = vsel %vm752, %v681, 0
  %v769 = vsel %vm752, %v682, 0
  %v772 = vsel %vm752, %v683, 0
  %v775 = vsel %vm752, %v684, 0
  %v778 = vsel %vm752, %v685, 0
  %v781 = vsel %vm752, %v686, 0
  %v784 = vsel %vm752, %v687, 0
  %v787 = vsel %vm752, %v688, 0
  %v790 = vsel %vm752, %v689, 0
  %v793 = vsel %vm752, %v690, 0
  %v796 = vsel %vm752, %v691, 0
  %v799 = vsel %vm752, %v692, 0
  %v802 = vsel %vm752, %v693, 0
  %v805 = vsel %vm752, %v694, 0
  %v808 = vsel %vm752, %v695, 0
  %v811 = vsel %vm752, %v696, 0
  %v814 = vsel %vm752, %v697, 0
  %v817 = vsel %vm752, %v698, 0
  %v820 = vsel %vm752, %v699, 0
  %v823 = vsel %vm752, %v700, 0
  %v826 = vsel %vm752, %v701, 0
  %v829 = vsel %vm752, %v702, 0
  %v832 = vsel %vm752, %v703, 0
  %v835 = vsel %vm752, %v704, 0
  %v838 = vsel %vm752, %v705, 0
  %v841 = vsel %vm752, %v706, 0
  %v844 = vsel %vm752, %v707, 0
  %v847 = vsel %vm752, %v708, 0
  %v850 = vsel %vm752, %v709, 0
  %v853 = vsel %vm752, %v710, 0
  %v856 = vsel %vm752, %v711, 0
  %v859 = vsel %vm752, %v712, 0
  %v862 = vsel %vm752, %v713, 0
  %v865 = vsel %vm752, %v714, 0
  %v868 = vsel %vm752, %v715, 0
  %v871 = vsel %vm752, %v716, 0
  %v874 = vsel %vm752, %v717, 0
  %v877 = vsel %vm752, %v718, 0
  %v880 = vsel %vm752, %v719, 0
  %v883 = vsel %vm752, %v720, 0
  %v886 = vsel %vm752, %v721, 0
  %v889 = vsel %vm752, %v722, 0
  %v892 = vsel %vm752, %v723, 0
  %v895 = vsel %vm752, %v724, 0
  %v898 = vsel %vm752, %v725, 0
  %v901 = vsel %vm752, %v726, 0
  %v904 = vsel %vm752, %v727, 0
  %v907 = vsel %vm752, %v728, 0
  %v910 = vsel %vm752, %v729, 0
  %v913 = vsel %vm752, %v730, 0
  %v916 = vsel %vm752, %v731, 0
  %v919 = vsel %vm752, %v732, 0
  %v922 = vsel %vm752, %v733, 0
  %v925 = vsel %vm752, %v734, 0
  %v928 = vsel %vm752, %v735, 0
  %v931 = vsel %vm752, %v736, 0
  %v934 = vsel %vm752, %v737, 0
  %v937 = vsel %vm752, %v738, 0
  %v940 = vsel %vm752, %v739, 0
  %v943 = vsel %vm752, %v740, 0
  %945 = vmatprep.subr.mxu0 0.0
  %946 = vmatpush1.msra.mxu0 0.0
  %947 = vmatprep.subr.mxu0 0.0
  %948 = vmatpush1.msra.mxu0 0.0
  %949 = vmatprep.subr.mxu0 0.0
  %950 = vmatpush1.msra.mxu0 0.0
  %951 = vmatprep.subr.mxu0 0.0
  %952 = vmatpush1.msra.mxu0 0.0
  %953 = vmatprep.subr.mxu0 0.0
  %954 = vmatpush1.msra.mxu0 0.0
  %955 = vmatprep.subr.mxu0 0.0
  %956 = vmatpush1.msra.mxu0 0.0
  %957 = vmatprep.subr.mxu0 0.0
  %958 = vmatpush1.msra.mxu0 0.0
  %959 = vmatprep.subr.mxu0 0.0
  %960 = vmatpush1.msra.mxu0 0.0
  %961 = vmatprep.subr.mxu0 0.0
  %962 = vmatpush1.msra.mxu0 0.0
  %963 = vmatprep.subr.mxu0 0.0
  %964 = vmatpush1.msra.mxu0 0.0
  %965 = vmatprep.subr.mxu0 0.0
  %966 = vmatpush1.msra.mxu0 0.0
  %967 = vmatprep.subr.mxu0 0.0
  %968 = vmatpush1.msra.mxu0 0.0
  %969 = vmatprep.subr.mxu0 0.0
  %970 = vmatpush1.msra.mxu0 %v744
  %971 = vmatprep.subr.mxu0 0.0
  %972 = vmatpush1.msra.mxu0 %v743
  %973 = vmatprep.subr.mxu0 0.0
  %974 = vmatpush1.msra.mxu0 %v742
  %975 = vmatprep.subr.mxu0 0.0
  %976 = vmatpush1.msra.mxu0 %v741
  %977 = vmatprep.subr.mxu0 0.0
  %978 = vmatpush2.msra.mxu0 0.0
  %979 = vmatprep.subr.mxu0 0.0
  %980 = vmatpush2.msra.mxu0 0.0
  %981 = vmatprep.subr.mxu0 0.0
  %982 = vmatpush2.msra.mxu0 0.0
  %983 = vmatprep.subr.mxu0 0.0
  %984 = vmatpush2.msra.mxu0 0.0
  %985 = vmatprep.subr.mxu0 0.0
  %986 = vmatpush2.msra.mxu0 0.0
  %987 = vmatprep.subr.mxu0 0.0
  %988 = vmatpush2.msra.mxu0 0.0
  %989 = vmatprep.subr.mxu0 0.0
  %990 = vmatpush2.msra.mxu0 0.0
  %991 = vmatprep.subr.mxu0 0.0
  %992 = vmatpush2.msra.mxu0 0.0
  %993 = vmatprep.subr.mxu0 0.0
  %994 = vmatpush2.msra.mxu0 0.0
  %995 = vmatprep.subr.mxu0 0.0
  %996 = vmatpush2.msra.mxu0 0.0
  %997 = vmatprep.subr.mxu0 0.0
  %998 = vmatpush2.msra.mxu0 0.0
  %999 = vmatprep.subr.mxu0 0.0
  %1000 = vmatpush2.msra.mxu0 0.0
  %1001 = vmatprep.subr.mxu0 0.0
  %1002 = vmatpush2.msra.mxu0 0.0
  %1003 = vmatprep.subr.mxu0 0.0
  %1004 = vmatpush2.msra.mxu0 0.0
  %1005 = vmatprep.subr.mxu0 0.0
  %1006 = vmatpush2.msra.mxu0 0.0
  %1007 = vmatprep.subr.mxu0 0.0
  %1008 = vmatpush2.msra.mxu0 0.0
  %1009 = vmatprep.mubr.f32.mxu0 0.0
  %1010 = vmatmul.mubr.f32.gmra.mxu0 %v754
  %v1011 = vpop.f32.mrf.mxu0
  %v1012 = vadd.f32 %v750, %v1011
  %v1013 = vpop.f32.mrf.mxu0
  %1014 = vmatprep.mubr.f32.mxu0 0.0
  %1015 = vmatmul.mubr.f32.gmra.mxu0 %v757
  %v1016 = vpop.f32.mrf.mxu0
  %v1017 = vadd.f32 %v750, %v1016
  %v1018 = vpop.f32.mrf.mxu0
  %1019 = vmatprep.mubr.f32.mxu0 0.0
  %1020 = vmatmul.mubr.f32.gmra.mxu0 %v760
  %v1021 = vpop.f32.mrf.mxu0
  %v1022 = vadd.f32 %v750, %v1021
  %v1023 = vpop.f32.mrf.mxu0
  %1024 = vmatprep.mubr.f32.mxu0 0.0
  %1025 = vmatmul.mubr.f32.gmra.mxu0 %v763
  %v1026 = vpop.f32.mrf.mxu0
  %v1027 = vadd.f32 %v750, %v1026
  %v1028 = vpop.f32.mrf.mxu0
  %1029 = vmatprep.mubr.f32.mxu0 0.0
  %1030 = vmatmul.mubr.f32.gmra.mxu0 %v766
  %v1031 = vpop.f32.mrf.mxu0
  %v1032 = vadd.f32 %v750, %v1031
  %v1033 = vpop.f32.mrf.mxu0
  %1034 = vmatprep.mubr.f32.mxu0 0.0
  %1035 = vmatmul.mubr.f32.gmra.mxu0 %v769
  %v1036 = vpop.f32.mrf.mxu0
  %v1037 = vadd.f32 %v750, %v1036
  %v1038 = vpop.f32.mrf.mxu0
  %1039 = vmatprep.mubr.f32.mxu0 0.0
  %1040 = vmatmul.mubr.f32.gmra.mxu0 %v772
  %v1041 = vpop.f32.mrf.mxu0
  %v1042 = vadd.f32 %v750, %v1041
  %v1043 = vpop.f32.mrf.mxu0
  %1044 = vmatprep.mubr.f32.mxu0 0.0
  %1045 = vmatmul.mubr.f32.gmra.mxu0 %v775
  %v1046 = vpop.f32.mrf.mxu0
  %v1047 = vadd.f32 %v750, %v1046
  %v1048 = vpop.f32.mrf.mxu0
  %1049 = vmatprep.mubr.f32.mxu0 0.0
  %1050 = vmatmul.mubr.f32.gmra.mxu0 %v778
  %v1051 = vpop.f32.mrf.mxu0
  %v1052 = vadd.f32 %v750, %v1051
  %v1053 = vpop.f32.mrf.mxu0
  %1054 = vmatprep.mubr.f32.mxu0 0.0
  %1055 = vmatmul.mubr.f32.gmra.mxu0 %v781
  %v1056 = vpop.f32.mrf.mxu0
  %v1057 = vadd.f32 %v750, %v1056
  %v1058 = vpop.f32.mrf.mxu0
  %1059 = vmatprep.mubr.f32.mxu0 0.0
  %1060 = vmatmul.mubr.f32.gmra.mxu0 %v784
  %v1061 = vpop.f32.mrf.mxu0
  %v1062 = vadd.f32 %v750, %v1061
  %v1063 = vpop.f32.mrf.mxu0
  %1064 = vmatprep.mubr.f32.mxu0 0.0
  %1065 = vmatmul.mubr.f32.gmra.mxu0 %v787
  %v1066 = vpop.f32.mrf.mxu0
  %v1067 = vadd.f32 %v750, %v1066
  %v1068 = vpop.f32.mrf.mxu0
  %1069 = vmatprep.mubr.f32.mxu0 0.0
  %1070 = vmatmul.mubr.f32.gmra.mxu0 %v790
  %v1071 = vpop.f32.mrf.mxu0
  %v1072 = vadd.f32 %v750, %v1071
  %v1073 = vpop.f32.mrf.mxu0
  %1074 = vmatprep.mubr.f32.mxu0 0.0
  %1075 = vmatmul.mubr.f32.gmra.mxu0 %v793
  %v1076 = vpop.f32.mrf.mxu0
  %v1077 = vadd.f32 %v750, %v1076
  %v1078 = vpop.f32.mrf.mxu0
  %1079 = vmatprep.mubr.f32.mxu0 0.0
  %1080 = vmatmul.mubr.f32.gmra.mxu0 %v796
  %v1081 = vpop.f32.mrf.mxu0
  %v1082 = vadd.f32 %v750, %v1081
  %v1083 = vpop.f32.mrf.mxu0
  %1084 = vmatprep.mubr.f32.mxu0 0.0
  %1085 = vmatmul.mubr.f32.gmra.mxu0 %v799
  %v1086 = vpop.f32.mrf.mxu0
  %v1087 = vadd.f32 %v750, %v1086
  %v1088 = vpop.f32.mrf.mxu0
  %1089 = vmatprep.mubr.f32.mxu0 0.0
  %1090 = vmatmul.mubr.f32.gmra.mxu0 %v802
  %v1091 = vpop.f32.mrf.mxu0
  %v1092 = vadd.f32 %v750, %v1091
  %v1093 = vpop.f32.mrf.mxu0
  %1094 = vmatprep.mubr.f32.mxu0 0.0
  %1095 = vmatmul.mubr.f32.gmra.mxu0 %v805
  %v1096 = vpop.f32.mrf.mxu0
  %v1097 = vadd.f32 %v750, %v1096
  %v1098 = vpop.f32.mrf.mxu0
  %1099 = vmatprep.mubr.f32.mxu0 0.0
  %1100 = vmatmul.mubr.f32.gmra.mxu0 %v808
  %v1101 = vpop.f32.mrf.mxu0
  %v1102 = vadd.f32 %v750, %v1101
  %v1103 = vpop.f32.mrf.mxu0
  %1104 = vmatprep.mubr.f32.mxu0 0.0
  %1105 = vmatmul.mubr.f32.gmra.mxu0 %v811
  %v1106 = vpop.f32.mrf.mxu0
  %v1107 = vadd.f32 %v750, %v1106
  %v1108 = vpop.f32.mrf.mxu0
  %1109 = vmatprep.mubr.f32.mxu0 0.0
  %1110 = vmatmul.mubr.f32.gmra.mxu0 %v814
  %v1111 = vpop.f32.mrf.mxu0
  %v1112 = vadd.f32 %v750, %v1111
  %v1113 = vpop.f32.mrf.mxu0
  %1114 = vmatprep.mubr.f32.mxu0 0.0
  %1115 = vmatmul.mubr.f32.gmra.mxu0 %v817
  %v1116 = vpop.f32.mrf.mxu0
  %v1117 = vadd.f32 %v750, %v1116
  %v1118 = vpop.f32.mrf.mxu0
  %1119 = vmatprep.mubr.f32.mxu0 0.0
  %1120 = vmatmul.mubr.f32.gmra.mxu0 %v820
  %v1121 = vpop.f32.mrf.mxu0
  %v1122 = vadd.f32 %v750, %v1121
  %v1123 = vpop.f32.mrf.mxu0
  %1124 = vmatprep.mubr.f32.mxu0 0.0
  %1125 = vmatmul.mubr.f32.gmra.mxu0 %v823
  %v1126 = vpop.f32.mrf.mxu0
  %v1127 = vadd.f32 %v750, %v1126
  %v1128 = vpop.f32.mrf.mxu0
  %1129 = vmatprep.mubr.f32.mxu0 0.0
  %1130 = vmatmul.mubr.f32.gmra.mxu0 %v826
  %v1131 = vpop.f32.mrf.mxu0
  %v1132 = vadd.f32 %v750, %v1131
  %v1133 = vpop.f32.mrf.mxu0
  %1134 = vmatprep.mubr.f32.mxu0 0.0
  %1135 = vmatmul.mubr.f32.gmra.mxu0 %v829
  %v1136 = vpop.f32.mrf.mxu0
  %v1137 = vadd.f32 %v750, %v1136
  %v1138 = vpop.f32.mrf.mxu0
  %1139 = vmatprep.mubr.f32.mxu0 0.0
  %1140 = vmatmul.mubr.f32.gmra.mxu0 %v832
  %v1141 = vpop.f32.mrf.mxu0
  %v1142 = vadd.f32 %v750, %v1141
  %v1143 = vpop.f32.mrf.mxu0
  %1144 = vmatprep.mubr.f32.mxu0 0.0
  %1145 = vmatmul.mubr.f32.gmra.mxu0 %v835
  %v1146 = vpop.f32.mrf.mxu0
  %v1147 = vadd.f32 %v750, %v1146
  %v1148 = vpop.f32.mrf.mxu0
  %1149 = vmatprep.mubr.f32.mxu0 0.0
  %1150 = vmatmul.mubr.f32.gmra.mxu0 %v838
  %v1151 = vpop.f32.mrf.mxu0
  %v1152 = vadd.f32 %v750, %v1151
  %v1153 = vpop.f32.mrf.mxu0
  %1154 = vmatprep.mubr.f32.mxu0 0.0
  %1155 = vmatmul.mubr.f32.gmra.mxu0 %v841
  %v1156 = vpop.f32.mrf.mxu0
  %v1157 = vadd.f32 %v750, %v1156
  %v1158 = vpop.f32.mrf.mxu0
  %1159 = vmatprep.mubr.f32.mxu0 0.0
  %1160 = vmatmul.mubr.f32.gmra.mxu0 %v844
  %v1161 = vpop.f32.mrf.mxu0
  %v1162 = vadd.f32 %v750, %v1161
  %v1163 = vpop.f32.mrf.mxu0
  %1164 = vmatprep.mubr.f32.mxu0 0.0
  %1165 = vmatmul.mubr.f32.gmra.mxu0 %v847
  %v1166 = vpop.f32.mrf.mxu0
  %v1167 = vadd.f32 %v750, %v1166
  %v1168 = vpop.f32.mrf.mxu0
  %1169 = vmatprep.mubr.f32.mxu0 0.0
  %1170 = vmatmul.mubr.f32.gmra.mxu0 %v850
  %v1171 = vpop.f32.mrf.mxu0
  %v1172 = vadd.f32 %v750, %v1171
  %v1173 = vpop.f32.mrf.mxu0
  %1174 = vmatprep.mubr.f32.mxu0 0.0
  %1175 = vmatmul.mubr.f32.gmra.mxu0 %v853
  %v1176 = vpop.f32.mrf.mxu0
  %v1177 = vadd.f32 %v750, %v1176
  %v1178 = vpop.f32.mrf.mxu0
  %1179 = vmatprep.mubr.f32.mxu0 0.0
  %1180 = vmatmul.mubr.f32.gmra.mxu0 %v856
  %v1181 = vpop.f32.mrf.mxu0
  %v1182 = vadd.f32 %v750, %v1181
  %v1183 = vpop.f32.mrf.mxu0
  %1184 = vmatprep.mubr.f32.mxu0 0.0
  %1185 = vmatmul.mubr.f32.gmra.mxu0 %v859
  %v1186 = vpop.f32.mrf.mxu0
  %v1187 = vadd.f32 %v750, %v1186
  %v1188 = vpop.f32.mrf.mxu0
  %1189 = vmatprep.mubr.f32.mxu0 0.0
  %1190 = vmatmul.mubr.f32.gmra.mxu0 %v862
  %v1191 = vpop.f32.mrf.mxu0
  %v1192 = vadd.f32 %v750, %v1191
  %v1193 = vpop.f32.mrf.mxu0
  %1194 = vmatprep.mubr.f32.mxu0 0.0
  %1195 = vmatmul.mubr.f32.gmra.mxu0 %v865
  %v1196 = vpop.f32.mrf.mxu0
  %v1197 = vadd.f32 %v750, %v1196
  %v1198 = vpop.f32.mrf.mxu0
  %1199 = vmatprep.mubr.f32.mxu0 0.0
  %1200 = vmatmul.mubr.f32.gmra.mxu0 %v868
  %v1201 = vpop.f32.mrf.mxu0
  %v1202 = vadd.f32 %v750, %v1201
  %v1203 = vpop.f32.mrf.mxu0
  %1204 = vmatprep.mubr.f32.mxu0 0.0
  %1205 = vmatmul.mubr.f32.gmra.mxu0 %v871
  %v1206 = vpop.f32.mrf.mxu0
  %v1207 = vadd.f32 %v750, %v1206
  %v1208 = vpop.f32.mrf.mxu0
  %1209 = vmatprep.mubr.f32.mxu0 0.0
  %1210 = vmatmul.mubr.f32.gmra.mxu0 %v874
  %v1211 = vpop.f32.mrf.mxu0
  %v1212 = vadd.f32 %v750, %v1211
  %v1213 = vpop.f32.mrf.mxu0
  %1214 = vmatprep.mubr.f32.mxu0 0.0
  %1215 = vmatmul.mubr.f32.gmra.mxu0 %v877
  %v1216 = vpop.f32.mrf.mxu0
  %v1217 = vadd.f32 %v750, %v1216
  %v1218 = vpop.f32.mrf.mxu0
  %1219 = vmatprep.mubr.f32.mxu0 0.0
  %1220 = vmatmul.mubr.f32.gmra.mxu0 %v880
  %v1221 = vpop.f32.mrf.mxu0
  %v1222 = vadd.f32 %v750, %v1221
  %v1223 = vpop.f32.mrf.mxu0
  %1224 = vmatprep.mubr.f32.mxu0 0.0
  %1225 = vmatmul.mubr.f32.gmra.mxu0 %v883
  %v1226 = vpop.f32.mrf.mxu0
  %v1227 = vadd.f32 %v750, %v1226
  %v1228 = vpop.f32.mrf.mxu0
  %1229 = vmatprep.mubr.f32.mxu0 0.0
  %1230 = vmatmul.mubr.f32.gmra.mxu0 %v886
  %v1231 = vpop.f32.mrf.mxu0
  %v1232 = vadd.f32 %v750, %v1231
  %v1233 = vpop.f32.mrf.mxu0
  %1234 = vmatprep.mubr.f32.mxu0 0.0
  %1235 = vmatmul.mubr.f32.gmra.mxu0 %v889
  %v1236 = vpop.f32.mrf.mxu0
  %v1237 = vadd.f32 %v750, %v1236
  %v1238 = vpop.f32.mrf.mxu0
  %1239 = vmatprep.mubr.f32.mxu0 0.0
  %1240 = vmatmul.mubr.f32.gmra.mxu0 %v892
  %v1241 = vpop.f32.mrf.mxu0
  %v1242 = vadd.f32 %v750, %v1241
  %v1243 = vpop.f32.mrf.mxu0
  %1244 = vmatprep.mubr.f32.mxu0 0.0
  %1245 = vmatmul.mubr.f32.gmra.mxu0 %v895
  %v1246 = vpop.f32.mrf.mxu0
  %v1247 = vadd.f32 %v750, %v1246
  %v1248 = vpop.f32.mrf.mxu0
  %1249 = vmatprep.mubr.f32.mxu0 0.0
  %1250 = vmatmul.mubr.f32.gmra.mxu0 %v898
  %v1251 = vpop.f32.mrf.mxu0
  %v1252 = vadd.f32 %v750, %v1251
  %v1253 = vpop.f32.mrf.mxu0
  %1254 = vmatprep.mubr.f32.mxu0 0.0
  %1255 = vmatmul.mubr.f32.gmra.mxu0 %v901
  %v1256 = vpop.f32.mrf.mxu0
  %v1257 = vadd.f32 %v750, %v1256
  %v1258 = vpop.f32.mrf.mxu0
  %1259 = vmatprep.mubr.f32.mxu0 0.0
  %1260 = vmatmul.mubr.f32.gmra.mxu0 %v904
  %v1261 = vpop.f32.mrf.mxu0
  %v1262 = vadd.f32 %v750, %v1261
  %v1263 = vpop.f32.mrf.mxu0
  %1264 = vmatprep.mubr.f32.mxu0 0.0
  %1265 = vmatmul.mubr.f32.gmra.mxu0 %v907
  %v1266 = vpop.f32.mrf.mxu0
  %v1267 = vadd.f32 %v750, %v1266
  %v1268 = vpop.f32.mrf.mxu0
  %1269 = vmatprep.mubr.f32.mxu0 0.0
  %1270 = vmatmul.mubr.f32.gmra.mxu0 %v910
  %v1271 = vpop.f32.mrf.mxu0
  %v1272 = vadd.f32 %v750, %v1271
  %v1273 = vpop.f32.mrf.mxu0
  %1274 = vmatprep.mubr.f32.mxu0 0.0
  %1275 = vmatmul.mubr.f32.gmra.mxu0 %v913
  %v1276 = vpop.f32.mrf.mxu0
  %v1277 = vadd.f32 %v750, %v1276
  %v1278 = vpop.f32.mrf.mxu0
  %1279 = vmatprep.mubr.f32.mxu0 0.0
  %1280 = vmatmul.mubr.f32.gmra.mxu0 %v916
  %v1281 = vpop.f32.mrf.mxu0
  %v1282 = vadd.f32 %v750, %v1281
  %v1283 = vpop.f32.mrf.mxu0
  %1284 = vmatprep.mubr.f32.mxu0 0.0
  %1285 = vmatmul.mubr.f32.gmra.mxu0 %v919
  %v1286 = vpop.f32.mrf.mxu0
  %v1287 = vadd.f32 %v750, %v1286
  %v1288 = vpop.f32.mrf.mxu0
  %1289 = vmatprep.mubr.f32.mxu0 0.0
  %1290 = vmatmul.mubr.f32.gmra.mxu0 %v922
  %v1291 = vpop.f32.mrf.mxu0
  %v1292 = vadd.f32 %v750, %v1291
  %v1293 = vpop.f32.mrf.mxu0
  %1294 = vmatprep.mubr.f32.mxu0 0.0
  %1295 = vmatmul.mubr.f32.gmra.mxu0 %v925
  %v1296 = vpop.f32.mrf.mxu0
  %v1297 = vadd.f32 %v750, %v1296
  %v1298 = vpop.f32.mrf.mxu0
  %1299 = vmatprep.mubr.f32.mxu0 0.0
  %1300 = vmatmul.mubr.f32.gmra.mxu0 %v928
  %v1301 = vpop.f32.mrf.mxu0
  %v1302 = vadd.f32 %v750, %v1301
  %v1303 = vpop.f32.mrf.mxu0
  %1304 = vmatprep.mubr.f32.mxu0 0.0
  %1305 = vmatmul.mubr.f32.gmra.mxu0 %v931
  %v1306 = vpop.f32.mrf.mxu0
  %v1307 = vadd.f32 %v750, %v1306
  %v1308 = vpop.f32.mrf.mxu0
  %1309 = vmatprep.mubr.f32.mxu0 0.0
  %1310 = vmatmul.mubr.f32.gmra.mxu0 %v934
  %v1311 = vpop.f32.mrf.mxu0
  %v1312 = vadd.f32 %v750, %v1311
  %v1313 = vpop.f32.mrf.mxu0
  %1314 = vmatprep.mubr.f32.mxu0 0.0
  %1315 = vmatmul.mubr.f32.gmra.mxu0 %v937
  %v1316 = vpop.f32.mrf.mxu0
  %v1317 = vadd.f32 %v750, %v1316
  %v1318 = vpop.f32.mrf.mxu0
  %1319 = vmatprep.mubr.f32.mxu0 0.0
  %1320 = vmatmul.mubr.f32.gmra.mxu0 %v940
  %v1321 = vpop.f32.mrf.mxu0
  %v1322 = vadd.f32 %v750, %v1321
  %v1323 = vpop.f32.mrf.mxu0
  %1324 = vmatprep.mubr.f32.mxu0 0.0
  %1325 = vmatmul.mubr.f32.gmra.mxu0 %v943
  %v1326 = vpop.f32.mrf.mxu0
  %v1327 = vadd.f32 %v750, %v1326
  %v1328 = vpop.f32.mrf.mxu0
  %1329 = vdwg.mxu0
  %v1330 = vmax.f32 %v1012, 0.0
  %v1331 = vmax.f32 %v1017, 0.0
  %v1332 = vmax.f32 %v1022, 0.0
  %v1333 = vmax.f32 %v1027, 0.0
  %v1334 = vmax.f32 %v1032, 0.0
  %v1335 = vmax.f32 %v1037, 0.0
  %v1336 = vmax.f32 %v1042, 0.0
  %v1337 = vmax.f32 %v1047, 0.0
  %v1338 = vmax.f32 %v1052, 0.0
  %v1339 = vmax.f32 %v1057, 0.0
  %v1340 = vmax.f32 %v1062, 0.0
  %v1341 = vmax.f32 %v1067, 0.0
  %v1342 = vmax.f32 %v1072, 0.0
  %v1343 = vmax.f32 %v1077, 0.0
  %v1344 = vmax.f32 %v1082, 0.0
  %v1345 = vmax.f32 %v1087, 0.0
  %v1346 = vmax.f32 %v1092, 0.0
  %v1347 = vmax.f32 %v1097, 0.0
  %v1348 = vmax.f32 %v1102, 0.0
  %v1349 = vmax.f32 %v1107, 0.0
  %v1350 = vmax.f32 %v1112, 0.0
  %v1351 = vmax.f32 %v1117, 0.0
  %v1352 = vmax.f32 %v1122, 0.0
  %v1353 = vmax.f32 %v1127, 0.0
  %v1354 = vmax.f32 %v1132, 0.0
  %v1355 = vmax.f32 %v1137, 0.0
  %v1356 = vmax.f32 %v1142, 0.0
  %v1357 = vmax.f32 %v1147, 0.0
  %v1358 = vmax.f32 %v1152, 0.0
  %v1359 = vmax.f32 %v1157, 0.0
  %v1360 = vmax.f32 %v1162, 0.0
  %v1361 = vmax.f32 %v1167, 0.0
  %v1362 = vmax.f32 %v1172, 0.0
  %v1363 = vmax.f32 %v1177, 0.0
  %v1364 = vmax.f32 %v1182, 0.0
  %v1365 = vmax.f32 %v1187, 0.0
  %v1366 = vmax.f32 %v1192, 0.0
  %v1367 = vmax.f32 %v1197, 0.0
  %v1368 = vmax.f32 %v1202, 0.0
  %v1369 = vmax.f32 %v1207, 0.0
  %v1370 = vmax.f32 %v1212, 0.0
  %v1371 = vmax.f32 %v1217, 0.0
  %v1372 = vmax.f32 %v1222, 0.0
  %v1373 = vmax.f32 %v1227, 0.0
  %v1374 = vmax.f32 %v1232, 0.0
  %v1375 = vmax.f32 %v1237, 0.0
  %v1376 = vmax.f32 %v1242, 0.0
  %v1377 = vmax.f32 %v1247, 0.0
  %v1378 = vmax.f32 %v1252, 0.0
  %v1379 = vmax.f32 %v1257, 0.0
  %v1380 = vmax.f32 %v1262, 0.0
  %v1381 = vmax.f32 %v1267, 0.0
  %v1382 = vmax.f32 %v1272, 0.0
  %v1383 = vmax.f32 %v1277, 0.0
  %v1384 = vmax.f32 %v1282, 0.0
  %v1385 = vmax.f32 %v1287, 0.0
  %v1386 = vmax.f32 %v1292, 0.0
  %v1387 = vmax.f32 %v1297, 0.0
  %v1388 = vmax.f32 %v1302, 0.0
  %v1389 = vmax.f32 %v1307, 0.0
  %v1390 = vmax.f32 %v1312, 0.0
  %v1391 = vmax.f32 %v1317, 0.0
  %v1392 = vmax.f32 %v1322, 0.0
  %v1393 = vmax.f32 %v1327, 0.0
  %s1394 = scalar_lea.vmem %s3, 32
  %v1395 = vld [vmem:[%s1394] sm:$0xff]
  %v1396 = vld [vmem:[%s1394 + $0x8] sm:$0xff]
  %v1397 = vld [vmem:[%s1394 + $0x10] sm:$0xff]
  %v1398 = vld [vmem:[%s1394 + $0x18] sm:$0xff]
  %s1399 = scalar_lea.vmem %s4, 1
  %v1400 = vld [vmem:[%s1399] sm:$0x1]
  %v1402 = vlaneseq
  %v1403 = vshrl.u32 %v1402, 7
  %v1404 = vsub.s32 0, %v1403
  %v1405 = vrot.slane %v1400, %v1404
  %v1408 = vsel %vm752, %v1330, 0
  %v1411 = vsel %vm752, %v1331, 0
  %v1414 = vsel %vm752, %v1332, 0
  %v1417 = vsel %vm752, %v1333, 0
  %v1420 = vsel %vm752, %v1334, 0
  %v1423 = vsel %vm752, %v1335, 0
  %v1426 = vsel %vm752, %v1336, 0
  %v1429 = vsel %vm752, %v1337, 0
  %v1432 = vsel %vm752, %v1338, 0
  %v1435 = vsel %vm752, %v1339, 0
  %v1438 = vsel %vm752, %v1340, 0
  %v1441 = vsel %vm752, %v1341, 0
  %v1444 = vsel %vm752, %v1342, 0
  %v1447 = vsel %vm752, %v1343, 0
  %v1450 = vsel %vm752, %v1344, 0
  %v1453 = vsel %vm752, %v1345, 0
  %v1456 = vsel %vm752, %v1346, 0
  %v1459 = vsel %vm752, %v1347, 0
  %v1462 = vsel %vm752, %v1348, 0
  %v1465 = vsel %vm752, %v1349, 0
  %v1468 = vsel %vm752, %v1350, 0
  %v1471 = vsel %vm752, %v1351, 0
  %v1474 = vsel %vm752, %v1352, 0
  %v1477 = vsel %vm752, %v1353, 0
  %v1480 = vsel %vm752, %v1354, 0
  %v1483 = vsel %vm752, %v1355, 0
  %v1486 = vsel %vm752, %v1356, 0
  %v1489 = vsel %vm752, %v1357, 0
  %v1492 = vsel %vm752, %v1358, 0
  %v1495 = vsel %vm752, %v1359, 0
  %v1498 = vsel %vm752, %v1360, 0
  %v1501 = vsel %vm752, %v1361, 0
  %v1504 = vsel %vm752, %v1362, 0
  %v1507 = vsel %vm752, %v1363, 0
  %v1510 = vsel %vm752, %v1364, 0
  %v1513 = vsel %vm752, %v1365, 0
  %v1516 = vsel %vm752, %v1366, 0
  %v1519 = vsel %vm752, %v1367, 0
  %v1522 = vsel %vm752, %v1368, 0
  %v1525 = vsel %vm752, %v1369, 0
  %v1528 = vsel %vm752, %v1370, 0
  %v1531 = vsel %vm752, %v1371, 0
  %v1534 = vsel %vm752, %v1372, 0
  %v1537 = vsel %vm752, %v1373, 0
  %v1540 = vsel %vm752, %v1374, 0
  %v1543 = vsel %vm752, %v1375, 0
  %v1546 = vsel %vm752, %v1376, 0
  %v1549 = vsel %vm752, %v1377, 0
  %v1552 = vsel %vm752, %v1378, 0
  %v1555 = vsel %vm752, %v1379, 0
  %v1558 = vsel %vm752, %v1380, 0
  %v1561 = vsel %vm752, %v1381, 0
  %v1564 = vsel %vm752, %v1382, 0
  %v1567 = vsel %vm752, %v1383, 0
  %v1570 = vsel %vm752, %v1384, 0
  %v1573 = vsel %vm752, %v1385, 0
  %v1576 = vsel %vm752, %v1386, 0
  %v1579 = vsel %vm752, %v1387, 0
  %v1582 = vsel %vm752, %v1388, 0
  %v1585 = vsel %vm752, %v1389, 0
  %v1588 = vsel %vm752, %v1390, 0
  %v1591 = vsel %vm752, %v1391, 0
  %v1594 = vsel %vm752, %v1392, 0
  %v1597 = vsel %vm752, %v1393, 0
  %1599 = vmatprep.subr.mxu0 0.0
  %1600 = vmatpush1.msra.mxu0 0.0
  %1601 = vmatprep.subr.mxu0 0.0
  %1602 = vmatpush1.msra.mxu0 0.0
  %1603 = vmatprep.subr.mxu0 0.0
  %1604 = vmatpush1.msra.mxu0 0.0
  %1605 = vmatprep.subr.mxu0 0.0
  %1606 = vmatpush1.msra.mxu0 0.0
  %1607 = vmatprep.subr.mxu0 0.0
  %1608 = vmatpush1.msra.mxu0 0.0
  %1609 = vmatprep.subr.mxu0 0.0
  %1610 = vmatpush1.msra.mxu0 0.0
  %1611 = vmatprep.subr.mxu0 0.0
  %1612 = vmatpush1.msra.mxu0 0.0
  %1613 = vmatprep.subr.mxu0 0.0
  %1614 = vmatpush1.msra.mxu0 0.0
  %1615 = vmatprep.subr.mxu0 0.0
  %1616 = vmatpush1.msra.mxu0 0.0
  %1617 = vmatprep.subr.mxu0 0.0
  %1618 = vmatpush1.msra.mxu0 0.0
  %1619 = vmatprep.subr.mxu0 0.0
  %1620 = vmatpush1.msra.mxu0 0.0
  %1621 = vmatprep.subr.mxu0 0.0
  %1622 = vmatpush1.msra.mxu0 0.0
  %1623 = vmatprep.subr.mxu0 0.0
  %1624 = vmatpush1.msra.mxu0 %v1398
  %1625 = vmatprep.subr.mxu0 0.0
  %1626 = vmatpush1.msra.mxu0 %v1397
  %1627 = vmatprep.subr.mxu0 0.0
  %1628 = vmatpush1.msra.mxu0 %v1396
  %1629 = vmatprep.subr.mxu0 0.0
  %1630 = vmatpush1.msra.mxu0 %v1395
  %1631 = vmatprep.subr.mxu0 0.0
  %1632 = vmatpush2.msra.mxu0 0.0
  %1633 = vmatprep.subr.mxu0 0.0
  %1634 = vmatpush2.msra.mxu0 0.0
  %1635 = vmatprep.subr.mxu0 0.0
  %1636 = vmatpush2.msra.mxu0 0.0
  %1637 = vmatprep.subr.mxu0 0.0
  %1638 = vmatpush2.msra.mxu0 0.0
  %1639 = vmatprep.subr.mxu0 0.0
  %1640 = vmatpush2.msra.mxu0 0.0
  %1641 = vmatprep.subr.mxu0 0.0
  %1642 = vmatpush2.msra.mxu0 0.0
  %1643 = vmatprep.subr.mxu0 0.0
  %1644 = vmatpush2.msra.mxu0 0.0
  %1645 = vmatprep.subr.mxu0 0.0
  %1646 = vmatpush2.msra.mxu0 0.0
  %1647 = vmatprep.subr.mxu0 0.0
  %1648 = vmatpush2.msra.mxu0 0.0
  %1649 = vmatprep.subr.mxu0 0.0
  %1650 = vmatpush2.msra.mxu0 0.0
  %1651 = vmatprep.subr.mxu0 0.0
  %1652 = vmatpush2.msra.mxu0 0.0
  %1653 = vmatprep.subr.mxu0 0.0
  %1654 = vmatpush2.msra.mxu0 0.0
  %1655 = vmatprep.subr.mxu0 0.0
  %1656 = vmatpush2.msra.mxu0 0.0
  %1657 = vmatprep.subr.mxu0 0.0
  %1658 = vmatpush2.msra.mxu0 0.0
  %1659 = vmatprep.subr.mxu0 0.0
  %1660 = vmatpush2.msra.mxu0 0.0
  %1661 = vmatprep.subr.mxu0 0.0
  %1662 = vmatpush2.msra.mxu0 0.0
  %1663 = vmatprep.mubr.f32.mxu0 0.0
  %1664 = vmatmul.mubr.f32.gmra.mxu0 %v1408
  %v1665 = vpop.f32.mrf.mxu0
  %v1666 = vadd.f32 %v1405, %v1665
  %v1667 = vpop.f32.mrf.mxu0
  %1668 = vmatprep.mubr.f32.mxu0 0.0
  %1669 = vmatmul.mubr.f32.gmra.mxu0 %v1411
  %v1670 = vpop.f32.mrf.mxu0
  %v1671 = vadd.f32 %v1405, %v1670
  %v1672 = vpop.f32.mrf.mxu0
  %1673 = vmatprep.mubr.f32.mxu0 0.0
  %1674 = vmatmul.mubr.f32.gmra.mxu0 %v1414
  %v1675 = vpop.f32.mrf.mxu0
  %v1676 = vadd.f32 %v1405, %v1675
  %v1677 = vpop.f32.mrf.mxu0
  %1678 = vmatprep.mubr.f32.mxu0 0.0
  %1679 = vmatmul.mubr.f32.gmra.mxu0 %v1417
  %v1680 = vpop.f32.mrf.mxu0
  %v1681 = vadd.f32 %v1405, %v1680
  %v1682 = vpop.f32.mrf.mxu0
  %1683 = vmatprep.mubr.f32.mxu0 0.0
  %1684 = vmatmul.mubr.f32.gmra.mxu0 %v1420
  %v1685 = vpop.f32.mrf.mxu0
  %v1686 = vadd.f32 %v1405, %v1685
  %v1687 = vpop.f32.mrf.mxu0
  %1688 = vmatprep.mubr.f32.mxu0 0.0
  %1689 = vmatmul.mubr.f32.gmra.mxu0 %v1423
  %v1690 = vpop.f32.mrf.mxu0
  %v1691 = vadd.f32 %v1405, %v1690
  %v1692 = vpop.f32.mrf.mxu0
  %1693 = vmatprep.mubr.f32.mxu0 0.0
  %1694 = vmatmul.mubr.f32.gmra.mxu0 %v1426
  %v1695 = vpop.f32.mrf.mxu0
  %v1696 = vadd.f32 %v1405, %v1695
  %v1697 = vpop.f32.mrf.mxu0
  %1698 = vmatprep.mubr.f32.mxu0 0.0
  %1699 = vmatmul.mubr.f32.gmra.mxu0 %v1429
  %v1700 = vpop.f32.mrf.mxu0
  %v1701 = vadd.f32 %v1405, %v1700
  %v1702 = vpop.f32.mrf.mxu0
  %1703 = vmatprep.mubr.f32.mxu0 0.0
  %1704 = vmatmul.mubr.f32.gmra.mxu0 %v1432
  %v1705 = vpop.f32.mrf.mxu0
  %v1706 = vadd.f32 %v1405, %v1705
  %v1707 = vpop.f32.mrf.mxu0
  %1708 = vmatprep.mubr.f32.mxu0 0.0
  %1709 = vmatmul.mubr.f32.gmra.mxu0 %v1435
  %v1710 = vpop.f32.mrf.mxu0
  %v1711 = vadd.f32 %v1405, %v1710
  %v1712 = vpop.f32.mrf.mxu0
  %1713 = vmatprep.mubr.f32.mxu0 0.0
  %1714 = vmatmul.mubr.f32.gmra.mxu0 %v1438
  %v1715 = vpop.f32.mrf.mxu0
  %v1716 = vadd.f32 %v1405, %v1715
  %v1717 = vpop.f32.mrf.mxu0
  %1718 = vmatprep.mubr.f32.mxu0 0.0
  %1719 = vmatmul.mubr.f32.gmra.mxu0 %v1441
  %v1720 = vpop.f32.mrf.mxu0
  %v1721 = vadd.f32 %v1405, %v1720
  %v1722 = vpop.f32.mrf.mxu0
  %1723 = vmatprep.mubr.f32.mxu0 0.0
  %1724 = vmatmul.mubr.f32.gmra.mxu0 %v1444
  %v1725 = vpop.f32.mrf.mxu0
  %v1726 = vadd.f32 %v1405, %v1725
  %v1727 = vpop.f32.mrf.mxu0
  %1728 = vmatprep.mubr.f32.mxu0 0.0
  %1729 = vmatmul.mubr.f32.gmra.mxu0 %v1447
  %v1730 = vpop.f32.mrf.mxu0
  %v1731 = vadd.f32 %v1405, %v1730
  %v1732 = vpop.f32.mrf.mxu0
  %1733 = vmatprep.mubr.f32.mxu0 0.0
  %1734 = vmatmul.mubr.f32.gmra.mxu0 %v1450
  %v1735 = vpop.f32.mrf.mxu0
  %v1736 = vadd.f32 %v1405, %v1735
  %v1737 = vpop.f32.mrf.mxu0
  %1738 = vmatprep.mubr.f32.mxu0 0.0
  %1739 = vmatmul.mubr.f32.gmra.mxu0 %v1453
  %v1740 = vpop.f32.mrf.mxu0
  %v1741 = vadd.f32 %v1405, %v1740
  %v1742 = vpop.f32.mrf.mxu0
  %1743 = vmatprep.mubr.f32.mxu0 0.0
  %1744 = vmatmul.mubr.f32.gmra.mxu0 %v1456
  %v1745 = vpop.f32.mrf.mxu0
  %v1746 = vadd.f32 %v1405, %v1745
  %v1747 = vpop.f32.mrf.mxu0
  %1748 = vmatprep.mubr.f32.mxu0 0.0
  %1749 = vmatmul.mubr.f32.gmra.mxu0 %v1459
  %v1750 = vpop.f32.mrf.mxu0
  %v1751 = vadd.f32 %v1405, %v1750
  %v1752 = vpop.f32.mrf.mxu0
  %1753 = vmatprep.mubr.f32.mxu0 0.0
  %1754 = vmatmul.mubr.f32.gmra.mxu0 %v1462
  %v1755 = vpop.f32.mrf.mxu0
  %v1756 = vadd.f32 %v1405, %v1755
  %v1757 = vpop.f32.mrf.mxu0
  %1758 = vmatprep.mubr.f32.mxu0 0.0
  %1759 = vmatmul.mubr.f32.gmra.mxu0 %v1465
  %v1760 = vpop.f32.mrf.mxu0
  %v1761 = vadd.f32 %v1405, %v1760
  %v1762 = vpop.f32.mrf.mxu0
  %1763 = vmatprep.mubr.f32.mxu0 0.0
  %1764 = vmatmul.mubr.f32.gmra.mxu0 %v1468
  %v1765 = vpop.f32.mrf.mxu0
  %v1766 = vadd.f32 %v1405, %v1765
  %v1767 = vpop.f32.mrf.mxu0
  %1768 = vmatprep.mubr.f32.mxu0 0.0
  %1769 = vmatmul.mubr.f32.gmra.mxu0 %v1471
  %v1770 = vpop.f32.mrf.mxu0
  %v1771 = vadd.f32 %v1405, %v1770
  %v1772 = vpop.f32.mrf.mxu0
  %1773 = vmatprep.mubr.f32.mxu0 0.0
  %1774 = vmatmul.mubr.f32.gmra.mxu0 %v1474
  %v1775 = vpop.f32.mrf.mxu0
  %v1776 = vadd.f32 %v1405, %v1775
  %v1777 = vpop.f32.mrf.mxu0
  %1778 = vmatprep.mubr.f32.mxu0 0.0
  %1779 = vmatmul.mubr.f32.gmra.mxu0 %v1477
  %v1780 = vpop.f32.mrf.mxu0
  %v1781 = vadd.f32 %v1405, %v1780
  %v1782 = vpop.f32.mrf.mxu0
  %1783 = vmatprep.mubr.f32.mxu0 0.0
  %1784 = vmatmul.mubr.f32.gmra.mxu0 %v1480
  %v1785 = vpop.f32.mrf.mxu0
  %v1786 = vadd.f32 %v1405, %v1785
  %v1787 = vpop.f32.mrf.mxu0
  %1788 = vmatprep.mubr.f32.mxu0 0.0
  %1789 = vmatmul.mubr.f32.gmra.mxu0 %v1483
  %v1790 = vpop.f32.mrf.mxu0
  %v1791 = vadd.f32 %v1405, %v1790
  %v1792 = vpop.f32.mrf.mxu0
  %1793 = vmatprep.mubr.f32.mxu0 0.0
  %1794 = vmatmul.mubr.f32.gmra.mxu0 %v1486
  %v1795 = vpop.f32.mrf.mxu0
  %v1796 = vadd.f32 %v1405, %v1795
  %v1797 = vpop.f32.mrf.mxu0
  %1798 = vmatprep.mubr.f32.mxu0 0.0
  %1799 = vmatmul.mubr.f32.gmra.mxu0 %v1489
  %v1800 = vpop.f32.mrf.mxu0
  %v1801 = vadd.f32 %v1405, %v1800
  %v1802 = vpop.f32.mrf.mxu0
  %1803 = vmatprep.mubr.f32.mxu0 0.0
  %1804 = vmatmul.mubr.f32.gmra.mxu0 %v1492
  %v1805 = vpop.f32.mrf.mxu0
  %v1806 = vadd.f32 %v1405, %v1805
  %v1807 = vpop.f32.mrf.mxu0
  %1808 = vmatprep.mubr.f32.mxu0 0.0
  %1809 = vmatmul.mubr.f32.gmra.mxu0 %v1495
  %v1810 = vpop.f32.mrf.mxu0
  %v1811 = vadd.f32 %v1405, %v1810
  %v1812 = vpop.f32.mrf.mxu0
  %1813 = vmatprep.mubr.f32.mxu0 0.0
  %1814 = vmatmul.mubr.f32.gmra.mxu0 %v1498
  %v1815 = vpop.f32.mrf.mxu0
  %v1816 = vadd.f32 %v1405, %v1815
  %v1817 = vpop.f32.mrf.mxu0
  %1818 = vmatprep.mubr.f32.mxu0 0.0
  %1819 = vmatmul.mubr.f32.gmra.mxu0 %v1501
  %v1820 = vpop.f32.mrf.mxu0
  %v1821 = vadd.f32 %v1405, %v1820
  %v1822 = vpop.f32.mrf.mxu0
  %1823 = vmatprep.mubr.f32.mxu0 0.0
  %1824 = vmatmul.mubr.f32.gmra.mxu0 %v1504
  %v1825 = vpop.f32.mrf.mxu0
  %v1826 = vadd.f32 %v1405, %v1825
  %v1827 = vpop.f32.mrf.mxu0
  %1828 = vmatprep.mubr.f32.mxu0 0.0
  %1829 = vmatmul.mubr.f32.gmra.mxu0 %v1507
  %v1830 = vpop.f32.mrf.mxu0
  %v1831 = vadd.f32 %v1405, %v1830
  %v1832 = vpop.f32.mrf.mxu0
  %1833 = vmatprep.mubr.f32.mxu0 0.0
  %1834 = vmatmul.mubr.f32.gmra.mxu0 %v1510
  %v1835 = vpop.f32.mrf.mxu0
  %v1836 = vadd.f32 %v1405, %v1835
  %v1837 = vpop.f32.mrf.mxu0
  %1838 = vmatprep.mubr.f32.mxu0 0.0
  %1839 = vmatmul.mubr.f32.gmra.mxu0 %v1513
  %v1840 = vpop.f32.mrf.mxu0
  %v1841 = vadd.f32 %v1405, %v1840
  %v1842 = vpop.f32.mrf.mxu0
  %1843 = vmatprep.mubr.f32.mxu0 0.0
  %1844 = vmatmul.mubr.f32.gmra.mxu0 %v1516
  %v1845 = vpop.f32.mrf.mxu0
  %v1846 = vadd.f32 %v1405, %v1845
  %v1847 = vpop.f32.mrf.mxu0
  %1848 = vmatprep.mubr.f32.mxu0 0.0
  %1849 = vmatmul.mubr.f32.gmra.mxu0 %v1519
  %v1850 = vpop.f32.mrf.mxu0
  %v1851 = vadd.f32 %v1405, %v1850
  %v1852 = vpop.f32.mrf.mxu0
  %1853 = vmatprep.mubr.f32.mxu0 0.0
  %1854 = vmatmul.mubr.f32.gmra.mxu0 %v1522
  %v1855 = vpop.f32.mrf.mxu0
  %v1856 = vadd.f32 %v1405, %v1855
  %v1857 = vpop.f32.mrf.mxu0
  %1858 = vmatprep.mubr.f32.mxu0 0.0
  %1859 = vmatmul.mubr.f32.gmra.mxu0 %v1525
  %v1860 = vpop.f32.mrf.mxu0
  %v1861 = vadd.f32 %v1405, %v1860
  %v1862 = vpop.f32.mrf.mxu0
  %1863 = vmatprep.mubr.f32.mxu0 0.0
  %1864 = vmatmul.mubr.f32.gmra.mxu0 %v1528
  %v1865 = vpop.f32.mrf.mxu0
  %v1866 = vadd.f32 %v1405, %v1865
  %v1867 = vpop.f32.mrf.mxu0
  %1868 = vmatprep.mubr.f32.mxu0 0.0
  %1869 = vmatmul.mubr.f32.gmra.mxu0 %v1531
  %v1870 = vpop.f32.mrf.mxu0
  %v1871 = vadd.f32 %v1405, %v1870
  %v1872 = vpop.f32.mrf.mxu0
  %1873 = vmatprep.mubr.f32.mxu0 0.0
  %1874 = vmatmul.mubr.f32.gmra.mxu0 %v1534
  %v1875 = vpop.f32.mrf.mxu0
  %v1876 = vadd.f32 %v1405, %v1875
  %v1877 = vpop.f32.mrf.mxu0
  %1878 = vmatprep.mubr.f32.mxu0 0.0
  %1879 = vmatmul.mubr.f32.gmra.mxu0 %v1537
  %v1880 = vpop.f32.mrf.mxu0
  %v1881 = vadd.f32 %v1405, %v1880
  %v1882 = vpop.f32.mrf.mxu0
  %1883 = vmatprep.mubr.f32.mxu0 0.0
  %1884 = vmatmul.mubr.f32.gmra.mxu0 %v1540
  %v1885 = vpop.f32.mrf.mxu0
  %v1886 = vadd.f32 %v1405, %v1885
  %v1887 = vpop.f32.mrf.mxu0
  %1888 = vmatprep.mubr.f32.mxu0 0.0
  %1889 = vmatmul.mubr.f32.gmra.mxu0 %v1543
  %v1890 = vpop.f32.mrf.mxu0
  %v1891 = vadd.f32 %v1405, %v1890
  %v1892 = vpop.f32.mrf.mxu0
  %1893 = vmatprep.mubr.f32.mxu0 0.0
  %1894 = vmatmul.mubr.f32.gmra.mxu0 %v1546
  %v1895 = vpop.f32.mrf.mxu0
  %v1896 = vadd.f32 %v1405, %v1895
  %v1897 = vpop.f32.mrf.mxu0
  %1898 = vmatprep.mubr.f32.mxu0 0.0
  %1899 = vmatmul.mubr.f32.gmra.mxu0 %v1549
  %v1900 = vpop.f32.mrf.mxu0
  %v1901 = vadd.f32 %v1405, %v1900
  %v1902 = vpop.f32.mrf.mxu0
  %1903 = vmatprep.mubr.f32.mxu0 0.0
  %1904 = vmatmul.mubr.f32.gmra.mxu0 %v1552
  %v1905 = vpop.f32.mrf.mxu0
  %v1906 = vadd.f32 %v1405, %v1905
  %v1907 = vpop.f32.mrf.mxu0
  %1908 = vmatprep.mubr.f32.mxu0 0.0
  %1909 = vmatmul.mubr.f32.gmra.mxu0 %v1555
  %v1910 = vpop.f32.mrf.mxu0
  %v1911 = vadd.f32 %v1405, %v1910
  %v1912 = vpop.f32.mrf.mxu0
  %1913 = vmatprep.mubr.f32.mxu0 0.0
  %1914 = vmatmul.mubr.f32.gmra.mxu0 %v1558
  %v1915 = vpop.f32.mrf.mxu0
  %v1916 = vadd.f32 %v1405, %v1915
  %v1917 = vpop.f32.mrf.mxu0
  %1918 = vmatprep.mubr.f32.mxu0 0.0
  %1919 = vmatmul.mubr.f32.gmra.mxu0 %v1561
  %v1920 = vpop.f32.mrf.mxu0
  %v1921 = vadd.f32 %v1405, %v1920
  %v1922 = vpop.f32.mrf.mxu0
  %1923 = vmatprep.mubr.f32.mxu0 0.0
  %1924 = vmatmul.mubr.f32.gmra.mxu0 %v1564
  %v1925 = vpop.f32.mrf.mxu0
  %v1926 = vadd.f32 %v1405, %v1925
  %v1927 = vpop.f32.mrf.mxu0
  %1928 = vmatprep.mubr.f32.mxu0 0.0
  %1929 = vmatmul.mubr.f32.gmra.mxu0 %v1567
  %v1930 = vpop.f32.mrf.mxu0
  %v1931 = vadd.f32 %v1405, %v1930
  %v1932 = vpop.f32.mrf.mxu0
  %1933 = vmatprep.mubr.f32.mxu0 0.0
  %1934 = vmatmul.mubr.f32.gmra.mxu0 %v1570
  %v1935 = vpop.f32.mrf.mxu0
  %v1936 = vadd.f32 %v1405, %v1935
  %v1937 = vpop.f32.mrf.mxu0
  %1938 = vmatprep.mubr.f32.mxu0 0.0
  %1939 = vmatmul.mubr.f32.gmra.mxu0 %v1573
  %v1940 = vpop.f32.mrf.mxu0
  %v1941 = vadd.f32 %v1405, %v1940
  %v1942 = vpop.f32.mrf.mxu0
  %1943 = vmatprep.mubr.f32.mxu0 0.0
  %1944 = vmatmul.mubr.f32.gmra.mxu0 %v1576
  %v1945 = vpop.f32.mrf.mxu0
  %v1946 = vadd.f32 %v1405, %v1945
  %v1947 = vpop.f32.mrf.mxu0
  %1948 = vmatprep.mubr.f32.mxu0 0.0
  %1949 = vmatmul.mubr.f32.gmra.mxu0 %v1579
  %v1950 = vpop.f32.mrf.mxu0
  %v1951 = vadd.f32 %v1405, %v1950
  %v1952 = vpop.f32.mrf.mxu0
  %1953 = vmatprep.mubr.f32.mxu0 0.0
  %1954 = vmatmul.mubr.f32.gmra.mxu0 %v1582
  %v1955 = vpop.f32.mrf.mxu0
  %v1956 = vadd.f32 %v1405, %v1955
  %v1957 = vpop.f32.mrf.mxu0
  %1958 = vmatprep.mubr.f32.mxu0 0.0
  %1959 = vmatmul.mubr.f32.gmra.mxu0 %v1585
  %v1960 = vpop.f32.mrf.mxu0
  %v1961 = vadd.f32 %v1405, %v1960
  %v1962 = vpop.f32.mrf.mxu0
  %1963 = vmatprep.mubr.f32.mxu0 0.0
  %1964 = vmatmul.mubr.f32.gmra.mxu0 %v1588
  %v1965 = vpop.f32.mrf.mxu0
  %v1966 = vadd.f32 %v1405, %v1965
  %v1967 = vpop.f32.mrf.mxu0
  %1968 = vmatprep.mubr.f32.mxu0 0.0
  %1969 = vmatmul.mubr.f32.gmra.mxu0 %v1591
  %v1970 = vpop.f32.mrf.mxu0
  %v1971 = vadd.f32 %v1405, %v1970
  %v1972 = vpop.f32.mrf.mxu0
  %1973 = vmatprep.mubr.f32.mxu0 0.0
  %1974 = vmatmul.mubr.f32.gmra.mxu0 %v1594
  %v1975 = vpop.f32.mrf.mxu0
  %v1976 = vadd.f32 %v1405, %v1975
  %v1977 = vpop.f32.mrf.mxu0
  %1978 = vmatprep.mubr.f32.mxu0 0.0
  %1979 = vmatmul.mubr.f32.gmra.mxu0 %v1597
  %v1980 = vpop.f32.mrf.mxu0
  %v1981 = vadd.f32 %v1405, %v1980
  %v1982 = vpop.f32.mrf.mxu0
  %1983 = vdwg.mxu0
  %v1984 = vmax.f32 %v1666, 0.0
  %v1985 = vmax.f32 %v1671, 0.0
  %v1986 = vmax.f32 %v1676, 0.0
  %v1987 = vmax.f32 %v1681, 0.0
  %v1988 = vmax.f32 %v1686, 0.0
  %v1989 = vmax.f32 %v1691, 0.0
  %v1990 = vmax.f32 %v1696, 0.0
  %v1991 = vmax.f32 %v1701, 0.0
  %v1992 = vmax.f32 %v1706, 0.0
  %v1993 = vmax.f32 %v1711, 0.0
  %v1994 = vmax.f32 %v1716, 0.0
  %v1995 = vmax.f32 %v1721, 0.0
  %v1996 = vmax.f32 %v1726, 0.0
  %v1997 = vmax.f32 %v1731, 0.0
  %v1998 = vmax.f32 %v1736, 0.0
  %v1999 = vmax.f32 %v1741, 0.0
  %v2000 = vmax.f32 %v1746, 0.0
  %v2001 = vmax.f32 %v1751, 0.0
  %v2002 = vmax.f32 %v1756, 0.0
  %v2003 = vmax.f32 %v1761, 0.0
  %v2004 = vmax.f32 %v1766, 0.0
  %v2005 = vmax.f32 %v1771, 0.0
  %v2006 = vmax.f32 %v1776, 0.0
  %v2007 = vmax.f32 %v1781, 0.0
  %v2008 = vmax.f32 %v1786, 0.0
  %v2009 = vmax.f32 %v1791, 0.0
  %v2010 = vmax.f32 %v1796, 0.0
  %v2011 = vmax.f32 %v1801, 0.0
  %v2012 = vmax.f32 %v1806, 0.0
  %v2013 = vmax.f32 %v1811, 0.0
  %v2014 = vmax.f32 %v1816, 0.0
  %v2015 = vmax.f32 %v1821, 0.0
  %v2016 = vmax.f32 %v1826, 0.0
  %v2017 = vmax.f32 %v1831, 0.0
  %v2018 = vmax.f32 %v1836, 0.0
  %v2019 = vmax.f32 %v1841, 0.0
  %v2020 = vmax.f32 %v1846, 0.0
  %v2021 = vmax.f32 %v1851, 0.0
  %v2022 = vmax.f32 %v1856, 0.0
  %v2023 = vmax.f32 %v1861, 0.0
  %v2024 = vmax.f32 %v1866, 0.0
  %v2025 = vmax.f32 %v1871, 0.0
  %v2026 = vmax.f32 %v1876, 0.0
  %v2027 = vmax.f32 %v1881, 0.0
  %v2028 = vmax.f32 %v1886, 0.0
  %v2029 = vmax.f32 %v1891, 0.0
  %v2030 = vmax.f32 %v1896, 0.0
  %v2031 = vmax.f32 %v1901, 0.0
  %v2032 = vmax.f32 %v1906, 0.0
  %v2033 = vmax.f32 %v1911, 0.0
  %v2034 = vmax.f32 %v1916, 0.0
  %v2035 = vmax.f32 %v1921, 0.0
  %v2036 = vmax.f32 %v1926, 0.0
  %v2037 = vmax.f32 %v1931, 0.0
  %v2038 = vmax.f32 %v1936, 0.0
  %v2039 = vmax.f32 %v1941, 0.0
  %v2040 = vmax.f32 %v1946, 0.0
  %v2041 = vmax.f32 %v1951, 0.0
  %v2042 = vmax.f32 %v1956, 0.0
  %v2043 = vmax.f32 %v1961, 0.0
  %v2044 = vmax.f32 %v1966, 0.0
  %v2045 = vmax.f32 %v1971, 0.0
  %v2046 = vmax.f32 %v1976, 0.0
  %v2047 = vmax.f32 %v1981, 0.0
  %v2048 = vld [vmem:[%s5] sm:$0xff]
  %v2049 = vld [vmem:[%s5 + $0x8] sm:$0xff]
  %v2050 = vld [vmem:[%s5 + $0x10] sm:$0xff]
  %v2051 = vld [vmem:[%s5 + $0x18] sm:$0xff]
  %v2052 = vld [vmem:[%s6] sm:$0x1]
  %v2054 = vlaneseq
  %v2055 = vshrl.u32 %v2054, 7
  %v2056 = vsub.s32 0, %v2055
  %v2057 = vrot.slane %v2052, %v2056
  %v2060 = vsel %vm752, %v1984, 0
  %v2063 = vsel %vm752, %v1985, 0
  %v2066 = vsel %vm752, %v1986, 0
  %v2069 = vsel %vm752, %v1987, 0
  %v2072 = vsel %vm752, %v1988, 0
  %v2075 = vsel %vm752, %v1989, 0
  %v2078 = vsel %vm752, %v1990, 0
  %v2081 = vsel %vm752, %v1991, 0
  %v2084 = vsel %vm752, %v1992, 0
  %v2087 = vsel %vm752, %v1993, 0
  %v2090 = vsel %vm752, %v1994, 0
  %v2093 = vsel %vm752, %v1995, 0
  %v2096 = vsel %vm752, %v1996, 0
  %v2099 = vsel %vm752, %v1997, 0
  %v2102 = vsel %vm752, %v1998, 0
  %v2105 = vsel %vm752, %v1999, 0
  %v2108 = vsel %vm752, %v2000, 0
  %v2111 = vsel %vm752, %v2001, 0
  %v2114 = vsel %vm752, %v2002, 0
  %v2117 = vsel %vm752, %v2003, 0
  %v2120 = vsel %vm752, %v2004, 0
  %v2123 = vsel %vm752, %v2005, 0
  %v2126 = vsel %vm752, %v2006, 0
  %v2129 = vsel %vm752, %v2007, 0
  %v2132 = vsel %vm752, %v2008, 0
  %v2135 = vsel %vm752, %v2009, 0
  %v2138 = vsel %vm752, %v2010, 0
  %v2141 = vsel %vm752, %v2011, 0
  %v2144 = vsel %vm752, %v2012, 0
  %v2147 = vsel %vm752, %v2013, 0
  %v2150 = vsel %vm752, %v2014, 0
  %v2153 = vsel %vm752, %v2015, 0
  %v2156 = vsel %vm752, %v2016, 0
  %v2159 = vsel %vm752, %v2017, 0
  %v2162 = vsel %vm752, %v2018, 0
  %v2165 = vsel %vm752, %v2019, 0
  %v2168 = vsel %vm752, %v2020, 0
  %v2171 = vsel %vm752, %v2021, 0
  %v2174 = vsel %vm752, %v2022, 0
  %v2177 = vsel %vm752, %v2023, 0
  %v2180 = vsel %vm752, %v2024, 0
  %v2183 = vsel %vm752, %v2025, 0
  %v2186 = vsel %vm752, %v2026, 0
  %v2189 = vsel %vm752, %v2027, 0
  %v2192 = vsel %vm752, %v2028, 0
  %v2195 = vsel %vm752, %v2029, 0
  %v2198 = vsel %vm752, %v2030, 0
  %v2201 = vsel %vm752, %v2031, 0
  %v2204 = vsel %vm752, %v2032, 0
  %v2207 = vsel %vm752, %v2033, 0
  %v2210 = vsel %vm752, %v2034, 0
  %v2213 = vsel %vm752, %v2035, 0
  %v2216 = vsel %vm752, %v2036, 0
  %v2219 = vsel %vm752, %v2037, 0
  %v2222 = vsel %vm752, %v2038, 0
  %v2225 = vsel %vm752, %v2039, 0
  %v2228 = vsel %vm752, %v2040, 0
  %v2231 = vsel %vm752, %v2041, 0
  %v2234 = vsel %vm752, %v2042, 0
  %v2237 = vsel %vm752, %v2043, 0
  %v2240 = vsel %vm752, %v2044, 0
  %v2243 = vsel %vm752, %v2045, 0
  %v2246 = vsel %vm752, %v2046, 0
  %v2249 = vsel %vm752, %v2047, 0
  %2251 = vmatprep.subr.mxu0 0.0
  %2252 = vmatpush1.msra.mxu0 0.0
  %2253 = vmatprep.subr.mxu0 0.0
  %2254 = vmatpush1.msra.mxu0 0.0
  %2255 = vmatprep.subr.mxu0 0.0
  %2256 = vmatpush1.msra.mxu0 0.0
  %2257 = vmatprep.subr.mxu0 0.0
  %2258 = vmatpush1.msra.mxu0 0.0
  %2259 = vmatprep.subr.mxu0 0.0
  %2260 = vmatpush1.msra.mxu0 0.0
  %2261 = vmatprep.subr.mxu0 0.0
  %2262 = vmatpush1.msra.mxu0 0.0
  %2263 = vmatprep.subr.mxu0 0.0
  %2264 = vmatpush1.msra.mxu0 0.0
  %2265 = vmatprep.subr.mxu0 0.0
  %2266 = vmatpush1.msra.mxu0 0.0
  %2267 = vmatprep.subr.mxu0 0.0
  %2268 = vmatpush1.msra.mxu0 0.0
  %2269 = vmatprep.subr.mxu0 0.0
  %2270 = vmatpush1.msra.mxu0 0.0
  %2271 = vmatprep.subr.mxu0 0.0
  %2272 = vmatpush1.msra.mxu0 0.0
  %2273 = vmatprep.subr.mxu0 0.0
  %2274 = vmatpush1.msra.mxu0 0.0
  %2275 = vmatprep.subr.mxu0 0.0
  %2276 = vmatpush1.msra.mxu0 %v2051
  %2277 = vmatprep.subr.mxu0 0.0
  %2278 = vmatpush1.msra.mxu0 %v2050
  %2279 = vmatprep.subr.mxu0 0.0
  %2280 = vmatpush1.msra.mxu0 %v2049
  %2281 = vmatprep.subr.mxu0 0.0
  %2282 = vmatpush1.msra.mxu0 %v2048
  %2283 = vmatprep.subr.mxu0 0.0
  %2284 = vmatpush2.msra.mxu0 0.0
  %2285 = vmatprep.subr.mxu0 0.0
  %2286 = vmatpush2.msra.mxu0 0.0
  %2287 = vmatprep.subr.mxu0 0.0
  %2288 = vmatpush2.msra.mxu0 0.0
  %2289 = vmatprep.subr.mxu0 0.0
  %2290 = vmatpush2.msra.mxu0 0.0
  %2291 = vmatprep.subr.mxu0 0.0
  %2292 = vmatpush2.msra.mxu0 0.0
  %2293 = vmatprep.subr.mxu0 0.0
  %2294 = vmatpush2.msra.mxu0 0.0
  %2295 = vmatprep.subr.mxu0 0.0
  %2296 = vmatpush2.msra.mxu0 0.0
  %2297 = vmatprep.subr.mxu0 0.0
  %2298 = vmatpush2.msra.mxu0 0.0
  %2299 = vmatprep.subr.mxu0 0.0
  %2300 = vmatpush2.msra.mxu0 0.0
  %2301 = vmatprep.subr.mxu0 0.0
  %2302 = vmatpush2.msra.mxu0 0.0
  %2303 = vmatprep.subr.mxu0 0.0
  %2304 = vmatpush2.msra.mxu0 0.0
  %2305 = vmatprep.subr.mxu0 0.0
  %2306 = vmatpush2.msra.mxu0 0.0
  %2307 = vmatprep.subr.mxu0 0.0
  %2308 = vmatpush2.msra.mxu0 0.0
  %2309 = vmatprep.subr.mxu0 0.0
  %2310 = vmatpush2.msra.mxu0 0.0
  %2311 = vmatprep.subr.mxu0 0.0
  %2312 = vmatpush2.msra.mxu0 0.0
  %2313 = vmatprep.subr.mxu0 0.0
  %2314 = vmatpush2.msra.mxu0 0.0
  %2315 = vmatprep.mubr.f32.mxu0 0.0
  %2316 = vmatmul.mubr.f32.gmra.mxu0 %v2060
  %v2317 = vpop.f32.mrf.mxu0
  %v2318 = vadd.f32 %v2057, %v2317
  %v2319 = vpop.f32.mrf.mxu0
  %2320 = vmatprep.mubr.f32.mxu0 0.0
  %2321 = vmatmul.mubr.f32.gmra.mxu0 %v2063
  %v2322 = vpop.f32.mrf.mxu0
  %v2323 = vadd.f32 %v2057, %v2322
  %v2324 = vpop.f32.mrf.mxu0
  %2325 = vmatprep.mubr.f32.mxu0 0.0
  %2326 = vmatmul.mubr.f32.gmra.mxu0 %v2066
  %v2327 = vpop.f32.mrf.mxu0
  %v2328 = vadd.f32 %v2057, %v2327
  %v2329 = vpop.f32.mrf.mxu0
  %2330 = vmatprep.mubr.f32.mxu0 0.0
  %2331 = vmatmul.mubr.f32.gmra.mxu0 %v2069
  %v2332 = vpop.f32.mrf.mxu0
  %v2333 = vadd.f32 %v2057, %v2332
  %v2334 = vpop.f32.mrf.mxu0
  %2335 = vmatprep.mubr.f32.mxu0 0.0
  %2336 = vmatmul.mubr.f32.gmra.mxu0 %v2072
  %v2337 = vpop.f32.mrf.mxu0
  %v2338 = vadd.f32 %v2057, %v2337
  %v2339 = vpop.f32.mrf.mxu0
  %2340 = vmatprep.mubr.f32.mxu0 0.0
  %2341 = vmatmul.mubr.f32.gmra.mxu0 %v2075
  %v2342 = vpop.f32.mrf.mxu0
  %v2343 = vadd.f32 %v2057, %v2342
  %v2344 = vpop.f32.mrf.mxu0
  %2345 = vmatprep.mubr.f32.mxu0 0.0
  %2346 = vmatmul.mubr.f32.gmra.mxu0 %v2078
  %v2347 = vpop.f32.mrf.mxu0
  %v2348 = vadd.f32 %v2057, %v2347
  %v2349 = vpop.f32.mrf.mxu0
  %2350 = vmatprep.mubr.f32.mxu0 0.0
  %2351 = vmatmul.mubr.f32.gmra.mxu0 %v2081
  %v2352 = vpop.f32.mrf.mxu0
  %v2353 = vadd.f32 %v2057, %v2352
  %v2354 = vpop.f32.mrf.mxu0
  %2355 = vmatprep.mubr.f32.mxu0 0.0
  %2356 = vmatmul.mubr.f32.gmra.mxu0 %v2084
  %v2357 = vpop.f32.mrf.mxu0
  %v2358 = vadd.f32 %v2057, %v2357
  %v2359 = vpop.f32.mrf.mxu0
  %2360 = vmatprep.mubr.f32.mxu0 0.0
  %2361 = vmatmul.mubr.f32.gmra.mxu0 %v2087
  %v2362 = vpop.f32.mrf.mxu0
  %v2363 = vadd.f32 %v2057, %v2362
  %v2364 = vpop.f32.mrf.mxu0
  %2365 = vmatprep.mubr.f32.mxu0 0.0
  %2366 = vmatmul.mubr.f32.gmra.mxu0 %v2090
  %v2367 = vpop.f32.mrf.mxu0
  %v2368 = vadd.f32 %v2057, %v2367
  %v2369 = vpop.f32.mrf.mxu0
  %2370 = vmatprep.mubr.f32.mxu0 0.0
  %2371 = vmatmul.mubr.f32.gmra.mxu0 %v2093
  %v2372 = vpop.f32.mrf.mxu0
  %v2373 = vadd.f32 %v2057, %v2372
  %v2374 = vpop.f32.mrf.mxu0
  %2375 = vmatprep.mubr.f32.mxu0 0.0
  %2376 = vmatmul.mubr.f32.gmra.mxu0 %v2096
  %v2377 = vpop.f32.mrf.mxu0
  %v2378 = vadd.f32 %v2057, %v2377
  %v2379 = vpop.f32.mrf.mxu0
  %2380 = vmatprep.mubr.f32.mxu0 0.0
  %2381 = vmatmul.mubr.f32.gmra.mxu0 %v2099
  %v2382 = vpop.f32.mrf.mxu0
  %v2383 = vadd.f32 %v2057, %v2382
  %v2384 = vpop.f32.mrf.mxu0
  %2385 = vmatprep.mubr.f32.mxu0 0.0
  %2386 = vmatmul.mubr.f32.gmra.mxu0 %v2102
  %v2387 = vpop.f32.mrf.mxu0
  %v2388 = vadd.f32 %v2057, %v2387
  %v2389 = vpop.f32.mrf.mxu0
  %2390 = vmatprep.mubr.f32.mxu0 0.0
  %2391 = vmatmul.mubr.f32.gmra.mxu0 %v2105
  %v2392 = vpop.f32.mrf.mxu0
  %v2393 = vadd.f32 %v2057, %v2392
  %v2394 = vpop.f32.mrf.mxu0
  %2395 = vmatprep.mubr.f32.mxu0 0.0
  %2396 = vmatmul.mubr.f32.gmra.mxu0 %v2108
  %v2397 = vpop.f32.mrf.mxu0
  %v2398 = vadd.f32 %v2057, %v2397
  %v2399 = vpop.f32.mrf.mxu0
  %2400 = vmatprep.mubr.f32.mxu0 0.0
  %2401 = vmatmul.mubr.f32.gmra.mxu0 %v2111
  %v2402 = vpop.f32.mrf.mxu0
  %v2403 = vadd.f32 %v2057, %v2402
  %v2404 = vpop.f32.mrf.mxu0
  %2405 = vmatprep.mubr.f32.mxu0 0.0
  %2406 = vmatmul.mubr.f32.gmra.mxu0 %v2114
  %v2407 = vpop.f32.mrf.mxu0
  %v2408 = vadd.f32 %v2057, %v2407
  %v2409 = vpop.f32.mrf.mxu0
  %2410 = vmatprep.mubr.f32.mxu0 0.0
  %2411 = vmatmul.mubr.f32.gmra.mxu0 %v2117
  %v2412 = vpop.f32.mrf.mxu0
  %v2413 = vadd.f32 %v2057, %v2412
  %v2414 = vpop.f32.mrf.mxu0
  %2415 = vmatprep.mubr.f32.mxu0 0.0
  %2416 = vmatmul.mubr.f32.gmra.mxu0 %v2120
  %v2417 = vpop.f32.mrf.mxu0
  %v2418 = vadd.f32 %v2057, %v2417
  %v2419 = vpop.f32.mrf.mxu0
  %2420 = vmatprep.mubr.f32.mxu0 0.0
  %2421 = vmatmul.mubr.f32.gmra.mxu0 %v2123
  %v2422 = vpop.f32.mrf.mxu0
  %v2423 = vadd.f32 %v2057, %v2422
  %v2424 = vpop.f32.mrf.mxu0
  %2425 = vmatprep.mubr.f32.mxu0 0.0
  %2426 = vmatmul.mubr.f32.gmra.mxu0 %v2126
  %v2427 = vpop.f32.mrf.mxu0
  %v2428 = vadd.f32 %v2057, %v2427
  %v2429 = vpop.f32.mrf.mxu0
  %2430 = vmatprep.mubr.f32.mxu0 0.0
  %2431 = vmatmul.mubr.f32.gmra.mxu0 %v2129
  %v2432 = vpop.f32.mrf.mxu0
  %v2433 = vadd.f32 %v2057, %v2432
  %v2434 = vpop.f32.mrf.mxu0
  %2435 = vmatprep.mubr.f32.mxu0 0.0
  %2436 = vmatmul.mubr.f32.gmra.mxu0 %v2132
  %v2437 = vpop.f32.mrf.mxu0
  %v2438 = vadd.f32 %v2057, %v2437
  %v2439 = vpop.f32.mrf.mxu0
  %2440 = vmatprep.mubr.f32.mxu0 0.0
  %2441 = vmatmul.mubr.f32.gmra.mxu0 %v2135
  %v2442 = vpop.f32.mrf.mxu0
  %v2443 = vadd.f32 %v2057, %v2442
  %v2444 = vpop.f32.mrf.mxu0
  %2445 = vmatprep.mubr.f32.mxu0 0.0
  %2446 = vmatmul.mubr.f32.gmra.mxu0 %v2138
  %v2447 = vpop.f32.mrf.mxu0
  %v2448 = vadd.f32 %v2057, %v2447
  %v2449 = vpop.f32.mrf.mxu0
  %2450 = vmatprep.mubr.f32.mxu0 0.0
  %2451 = vmatmul.mubr.f32.gmra.mxu0 %v2141
  %v2452 = vpop.f32.mrf.mxu0
  %v2453 = vadd.f32 %v2057, %v2452
  %v2454 = vpop.f32.mrf.mxu0
  %2455 = vmatprep.mubr.f32.mxu0 0.0
  %2456 = vmatmul.mubr.f32.gmra.mxu0 %v2144
  %v2457 = vpop.f32.mrf.mxu0
  %v2458 = vadd.f32 %v2057, %v2457
  %v2459 = vpop.f32.mrf.mxu0
  %2460 = vmatprep.mubr.f32.mxu0 0.0
  %2461 = vmatmul.mubr.f32.gmra.mxu0 %v2147
  %v2462 = vpop.f32.mrf.mxu0
  %v2463 = vadd.f32 %v2057, %v2462
  %v2464 = vpop.f32.mrf.mxu0
  %2465 = vmatprep.mubr.f32.mxu0 0.0
  %2466 = vmatmul.mubr.f32.gmra.mxu0 %v2150
  %v2467 = vpop.f32.mrf.mxu0
  %v2468 = vadd.f32 %v2057, %v2467
  %v2469 = vpop.f32.mrf.mxu0
  %2470 = vmatprep.mubr.f32.mxu0 0.0
  %2471 = vmatmul.mubr.f32.gmra.mxu0 %v2153
  %v2472 = vpop.f32.mrf.mxu0
  %v2473 = vadd.f32 %v2057, %v2472
  %v2474 = vpop.f32.mrf.mxu0
  %2475 = vmatprep.mubr.f32.mxu0 0.0
  %2476 = vmatmul.mubr.f32.gmra.mxu0 %v2156
  %v2477 = vpop.f32.mrf.mxu0
  %v2478 = vadd.f32 %v2057, %v2477
  %v2479 = vpop.f32.mrf.mxu0
  %2480 = vmatprep.mubr.f32.mxu0 0.0
  %2481 = vmatmul.mubr.f32.gmra.mxu0 %v2159
  %v2482 = vpop.f32.mrf.mxu0
  %v2483 = vadd.f32 %v2057, %v2482
  %v2484 = vpop.f32.mrf.mxu0
  %2485 = vmatprep.mubr.f32.mxu0 0.0
  %2486 = vmatmul.mubr.f32.gmra.mxu0 %v2162
  %v2487 = vpop.f32.mrf.mxu0
  %v2488 = vadd.f32 %v2057, %v2487
  %v2489 = vpop.f32.mrf.mxu0
  %2490 = vmatprep.mubr.f32.mxu0 0.0
  %2491 = vmatmul.mubr.f32.gmra.mxu0 %v2165
  %v2492 = vpop.f32.mrf.mxu0
  %v2493 = vadd.f32 %v2057, %v2492
  %v2494 = vpop.f32.mrf.mxu0
  %2495 = vmatprep.mubr.f32.mxu0 0.0
  %2496 = vmatmul.mubr.f32.gmra.mxu0 %v2168
  %v2497 = vpop.f32.mrf.mxu0
  %v2498 = vadd.f32 %v2057, %v2497
  %v2499 = vpop.f32.mrf.mxu0
  %2500 = vmatprep.mubr.f32.mxu0 0.0
  %2501 = vmatmul.mubr.f32.gmra.mxu0 %v2171
  %v2502 = vpop.f32.mrf.mxu0
  %v2503 = vadd.f32 %v2057, %v2502
  %v2504 = vpop.f32.mrf.mxu0
  %2505 = vmatprep.mubr.f32.mxu0 0.0
  %2506 = vmatmul.mubr.f32.gmra.mxu0 %v2174
  %v2507 = vpop.f32.mrf.mxu0
  %v2508 = vadd.f32 %v2057, %v2507
  %v2509 = vpop.f32.mrf.mxu0
  %2510 = vmatprep.mubr.f32.mxu0 0.0
  %2511 = vmatmul.mubr.f32.gmra.mxu0 %v2177
  %v2512 = vpop.f32.mrf.mxu0
  %v2513 = vadd.f32 %v2057, %v2512
  %v2514 = vpop.f32.mrf.mxu0
  %2515 = vmatprep.mubr.f32.mxu0 0.0
  %2516 = vmatmul.mubr.f32.gmra.mxu0 %v2180
  %v2517 = vpop.f32.mrf.mxu0
  %v2518 = vadd.f32 %v2057, %v2517
  %v2519 = vpop.f32.mrf.mxu0
  %2520 = vmatprep.mubr.f32.mxu0 0.0
  %2521 = vmatmul.mubr.f32.gmra.mxu0 %v2183
  %v2522 = vpop.f32.mrf.mxu0
  %v2523 = vadd.f32 %v2057, %v2522
  %v2524 = vpop.f32.mrf.mxu0
  %2525 = vmatprep.mubr.f32.mxu0 0.0
  %2526 = vmatmul.mubr.f32.gmra.mxu0 %v2186
  %v2527 = vpop.f32.mrf.mxu0
  %v2528 = vadd.f32 %v2057, %v2527
  %v2529 = vpop.f32.mrf.mxu0
  %2530 = vmatprep.mubr.f32.mxu0 0.0
  %2531 = vmatmul.mubr.f32.gmra.mxu0 %v2189
  %v2532 = vpop.f32.mrf.mxu0
  %v2533 = vadd.f32 %v2057, %v2532
  %v2534 = vpop.f32.mrf.mxu0
  %2535 = vmatprep.mubr.f32.mxu0 0.0
  %2536 = vmatmul.mubr.f32.gmra.mxu0 %v2192
  %v2537 = vpop.f32.mrf.mxu0
  %v2538 = vadd.f32 %v2057, %v2537
  %v2539 = vpop.f32.mrf.mxu0
  %2540 = vmatprep.mubr.f32.mxu0 0.0
  %2541 = vmatmul.mubr.f32.gmra.mxu0 %v2195
  %v2542 = vpop.f32.mrf.mxu0
  %v2543 = vadd.f32 %v2057, %v2542
  %v2544 = vpop.f32.mrf.mxu0
  %2545 = vmatprep.mubr.f32.mxu0 0.0
  %2546 = vmatmul.mubr.f32.gmra.mxu0 %v2198
  %v2547 = vpop.f32.mrf.mxu0
  %v2548 = vadd.f32 %v2057, %v2547
  %v2549 = vpop.f32.mrf.mxu0
  %2550 = vmatprep.mubr.f32.mxu0 0.0
  %2551 = vmatmul.mubr.f32.gmra.mxu0 %v2201
  %v2552 = vpop.f32.mrf.mxu0
  %v2553 = vadd.f32 %v2057, %v2552
  %v2554 = vpop.f32.mrf.mxu0
  %2555 = vmatprep.mubr.f32.mxu0 0.0
  %2556 = vmatmul.mubr.f32.gmra.mxu0 %v2204
  %v2557 = vpop.f32.mrf.mxu0
  %v2558 = vadd.f32 %v2057, %v2557
  %v2559 = vpop.f32.mrf.mxu0
  %2560 = vmatprep.mubr.f32.mxu0 0.0
  %2561 = vmatmul.mubr.f32.gmra.mxu0 %v2207
  %v2562 = vpop.f32.mrf.mxu0
  %v2563 = vadd.f32 %v2057, %v2562
  %v2564 = vpop.f32.mrf.mxu0
  %2565 = vmatprep.mubr.f32.mxu0 0.0
  %2566 = vmatmul.mubr.f32.gmra.mxu0 %v2210
  %v2567 = vpop.f32.mrf.mxu0
  %v2568 = vadd.f32 %v2057, %v2567
  %v2569 = vpop.f32.mrf.mxu0
  %2570 = vmatprep.mubr.f32.mxu0 0.0
  %2571 = vmatmul.mubr.f32.gmra.mxu0 %v2213
  %v2572 = vpop.f32.mrf.mxu0
  %v2573 = vadd.f32 %v2057, %v2572
  %v2574 = vpop.f32.mrf.mxu0
  %2575 = vmatprep.mubr.f32.mxu0 0.0
  %2576 = vmatmul.mubr.f32.gmra.mxu0 %v2216
  %v2577 = vpop.f32.mrf.mxu0
  %v2578 = vadd.f32 %v2057, %v2577
  %v2579 = vpop.f32.mrf.mxu0
  %2580 = vmatprep.mubr.f32.mxu0 0.0
  %2581 = vmatmul.mubr.f32.gmra.mxu0 %v2219
  %v2582 = vpop.f32.mrf.mxu0
  %v2583 = vadd.f32 %v2057, %v2582
  %v2584 = vpop.f32.mrf.mxu0
  %2585 = vmatprep.mubr.f32.mxu0 0.0
  %2586 = vmatmul.mubr.f32.gmra.mxu0 %v2222
  %v2587 = vpop.f32.mrf.mxu0
  %v2588 = vadd.f32 %v2057, %v2587
  %v2589 = vpop.f32.mrf.mxu0
  %2590 = vmatprep.mubr.f32.mxu0 0.0
  %2591 = vmatmul.mubr.f32.gmra.mxu0 %v2225
  %v2592 = vpop.f32.mrf.mxu0
  %v2593 = vadd.f32 %v2057, %v2592
  %v2594 = vpop.f32.mrf.mxu0
  %2595 = vmatprep.mubr.f32.mxu0 0.0
  %2596 = vmatmul.mubr.f32.gmra.mxu0 %v2228
  %v2597 = vpop.f32.mrf.mxu0
  %v2598 = vadd.f32 %v2057, %v2597
  %v2599 = vpop.f32.mrf.mxu0
  %2600 = vmatprep.mubr.f32.mxu0 0.0
  %2601 = vmatmul.mubr.f32.gmra.mxu0 %v2231
  %v2602 = vpop.f32.mrf.mxu0
  %v2603 = vadd.f32 %v2057, %v2602
  %v2604 = vpop.f32.mrf.mxu0
  %2605 = vmatprep.mubr.f32.mxu0 0.0
  %2606 = vmatmul.mubr.f32.gmra.mxu0 %v2234
  %v2607 = vpop.f32.mrf.mxu0
  %v2608 = vadd.f32 %v2057, %v2607
  %v2609 = vpop.f32.mrf.mxu0
  %2610 = vmatprep.mubr.f32.mxu0 0.0
  %2611 = vmatmul.mubr.f32.gmra.mxu0 %v2237
  %v2612 = vpop.f32.mrf.mxu0
  %v2613 = vadd.f32 %v2057, %v2612
  %v2614 = vpop.f32.mrf.mxu0
  %2615 = vmatprep.mubr.f32.mxu0 0.0
  %2616 = vmatmul.mubr.f32.gmra.mxu0 %v2240
  %v2617 = vpop.f32.mrf.mxu0
  %v2618 = vadd.f32 %v2057, %v2617
  %v2619 = vpop.f32.mrf.mxu0
  %2620 = vmatprep.mubr.f32.mxu0 0.0
  %2621 = vmatmul.mubr.f32.gmra.mxu0 %v2243
  %v2622 = vpop.f32.mrf.mxu0
  %v2623 = vadd.f32 %v2057, %v2622
  %v2624 = vpop.f32.mrf.mxu0
  %2625 = vmatprep.mubr.f32.mxu0 0.0
  %2626 = vmatmul.mubr.f32.gmra.mxu0 %v2246
  %v2627 = vpop.f32.mrf.mxu0
  %v2628 = vadd.f32 %v2057, %v2627
  %v2629 = vpop.f32.mrf.mxu0
  %2630 = vmatprep.mubr.f32.mxu0 0.0
  %2631 = vmatmul.mubr.f32.gmra.mxu0 %v2249
  %v2632 = vpop.f32.mrf.mxu0
  %v2633 = vadd.f32 %v2057, %v2632
  %v2634 = vpop.f32.mrf.mxu0
  %2635 = vdwg.mxu0
  %vm2636 = vcmask 64512
  %2637 = vst.msk [vmem:[%s7] sm:$0xff] %vm2636, %v2318
  %2638 = vst.msk [vmem:[%s7 + $0x8] sm:$0xff] %vm2636, %v2323
  %2639 = vst.msk [vmem:[%s7 + $0x10] sm:$0xff] %vm2636, %v2328
  %2640 = vst.msk [vmem:[%s7 + $0x18] sm:$0xff] %vm2636, %v2333
  %2641 = vst.msk [vmem:[%s7 + $0x20] sm:$0xff] %vm2636, %v2338
  %2642 = vst.msk [vmem:[%s7 + $0x28] sm:$0xff] %vm2636, %v2343
  %2643 = vst.msk [vmem:[%s7 + $0x30] sm:$0xff] %vm2636, %v2348
  %2644 = vst.msk [vmem:[%s7 + $0x38] sm:$0xff] %vm2636, %v2353
  %2645 = vst.msk [vmem:[%s7 + $0x40] sm:$0xff] %vm2636, %v2358
  %2646 = vst.msk [vmem:[%s7 + $0x48] sm:$0xff] %vm2636, %v2363
  %2647 = vst.msk [vmem:[%s7 + $0x50] sm:$0xff] %vm2636, %v2368
  %2648 = vst.msk [vmem:[%s7 + $0x58] sm:$0xff] %vm2636, %v2373
  %2649 = vst.msk [vmem:[%s7 + $0x60] sm:$0xff] %vm2636, %v2378
  %2650 = vst.msk [vmem:[%s7 + $0x68] sm:$0xff] %vm2636, %v2383
  %2651 = vst.msk [vmem:[%s7 + $0x70] sm:$0xff] %vm2636, %v2388
  %2652 = vst.msk [vmem:[%s7 + $0x78] sm:$0xff] %vm2636, %v2393
  %2653 = vst.msk [vmem:[%s7 + $0x80] sm:$0xff] %vm2636, %v2398
  %2654 = vst.msk [vmem:[%s7 + $0x88] sm:$0xff] %vm2636, %v2403
  %2655 = vst.msk [vmem:[%s7 + $0x90] sm:$0xff] %vm2636, %v2408
  %2656 = vst.msk [vmem:[%s7 + $0x98] sm:$0xff] %vm2636, %v2413
  %2657 = vst.msk [vmem:[%s7 + $0xa0] sm:$0xff] %vm2636, %v2418
  %2658 = vst.msk [vmem:[%s7 + $0xa8] sm:$0xff] %vm2636, %v2423
  %2659 = vst.msk [vmem:[%s7 + $0xb0] sm:$0xff] %vm2636, %v2428
  %2660 = vst.msk [vmem:[%s7 + $0xb8] sm:$0xff] %vm2636, %v2433
  %2661 = vst.msk [vmem:[%s7 + $0xc0] sm:$0xff] %vm2636, %v2438
  %2662 = vst.msk [vmem:[%s7 + $0xc8] sm:$0xff] %vm2636, %v2443
  %2663 = vst.msk [vmem:[%s7 + $0xd0] sm:$0xff] %vm2636, %v2448
  %2664 = vst.msk [vmem:[%s7 + $0xd8] sm:$0xff] %vm2636, %v2453
  %2665 = vst.msk [vmem:[%s7 + $0xe0] sm:$0xff] %vm2636, %v2458
  %2666 = vst.msk [vmem:[%s7 + $0xe8] sm:$0xff] %vm2636, %v2463
  %2667 = vst.msk [vmem:[%s7 + $0xf0] sm:$0xff] %vm2636, %v2468
  %2668 = vst.msk [vmem:[%s7 + $0xf8] sm:$0xff] %vm2636, %v2473
  %2669 = vst.msk [vmem:[%s7 + $0x100] sm:$0xff] %vm2636, %v2478
  %2670 = vst.msk [vmem:[%s7 + $0x108] sm:$0xff] %vm2636, %v2483
  %2671 = vst.msk [vmem:[%s7 + $0x110] sm:$0xff] %vm2636, %v2488
  %2672 = vst.msk [vmem:[%s7 + $0x118] sm:$0xff] %vm2636, %v2493
  %2673 = vst.msk [vmem:[%s7 + $0x120] sm:$0xff] %vm2636, %v2498
  %2674 = vst.msk [vmem:[%s7 + $0x128] sm:$0xff] %vm2636, %v2503
  %2675 = vst.msk [vmem:[%s7 + $0x130] sm:$0xff] %vm2636, %v2508
  %2676 = vst.msk [vmem:[%s7 + $0x138] sm:$0xff] %vm2636, %v2513
  %2677 = vst.msk [vmem:[%s7 + $0x140] sm:$0xff] %vm2636, %v2518
  %2678 = vst.msk [vmem:[%s7 + $0x148] sm:$0xff] %vm2636, %v2523
  %2679 = vst.msk [vmem:[%s7 + $0x150] sm:$0xff] %vm2636, %v2528
  %2680 = vst.msk [vmem:[%s7 + $0x158] sm:$0xff] %vm2636, %v2533
  %2681 = vst.msk [vmem:[%s7 + $0x160] sm:$0xff] %vm2636, %v2538
  %2682 = vst.msk [vmem:[%s7 + $0x168] sm:$0xff] %vm2636, %v2543
  %2683 = vst.msk [vmem:[%s7 + $0x170] sm:$0xff] %vm2636, %v2548
  %2684 = vst.msk [vmem:[%s7 + $0x178] sm:$0xff] %vm2636, %v2553
  %2685 = vst.msk [vmem:[%s7 + $0x180] sm:$0xff] %vm2636, %v2558
  %2686 = vst.msk [vmem:[%s7 + $0x188] sm:$0xff] %vm2636, %v2563
  %2687 = vst.msk [vmem:[%s7 + $0x190] sm:$0xff] %vm2636, %v2568
  %2688 = vst.msk [vmem:[%s7 + $0x198] sm:$0xff] %vm2636, %v2573
  %2689 = vst.msk [vmem:[%s7 + $0x1a0] sm:$0xff] %vm2636, %v2578
  %2690 = vst.msk [vmem:[%s7 + $0x1a8] sm:$0xff] %vm2636, %v2583
  %2691 = vst.msk [vmem:[%s7 + $0x1b0] sm:$0xff] %vm2636, %v2588
  %2692 = vst.msk [vmem:[%s7 + $0x1b8] sm:$0xff] %vm2636, %v2593
  %2693 = vst.msk [vmem:[%s7 + $0x1c0] sm:$0xff] %vm2636, %v2598
  %2694 = vst.msk [vmem:[%s7 + $0x1c8] sm:$0xff] %vm2636, %v2603
  %2695 = vst.msk [vmem:[%s7 + $0x1d0] sm:$0xff] %vm2636, %v2608
  %2696 = vst.msk [vmem:[%s7 + $0x1d8] sm:$0xff] %vm2636, %v2613
  %2697 = vst.msk [vmem:[%s7 + $0x1e0] sm:$0xff] %vm2636, %v2618
  %2698 = vst.msk [vmem:[%s7 + $0x1e8] sm:$0xff] %vm2636, %v2623
  %2699 = vst.msk [vmem:[%s7 + $0x1f0] sm:$0xff] %vm2636, %v2628
  %2700 = vst.msk [vmem:[%s7 + $0x1f8] sm:$0xff] %vm2636, %v2633
  // Predicated region
  $region30: #{tpu_custom_call.1} parent=0 // pred_check
    _
  $region31: #{tpu_custom_call.1} parent=0 // pred_check_branch
    %2702 = sbr.rel (0) target = $region33
  $region32: #{tpu_custom_call.1} parent=0 // pred_region
    _
  $region33: #{tpu_custom_call.1} parent=0 // pred_fallthru
    _
  // Predicated region
  $region34: #{tpu_custom_call.1} parent=0 // pred_check
    _
  $region35: #{tpu_custom_call.1} parent=0 // pred_check_branch
    %2704 = sbr.rel (0) target = $region37
  $region36: #{tpu_custom_call.1} parent=0 // pred_region
    _
  $region37: #{tpu_custom_call.1} parent=0 // pred_fallthru
    _

</llo_original>
